<compile_context>
chip_gen: v7x
topology: tpu7x:2x2x1
jax: 0.10.0
libtpu: 0.0.40
codegen_flags: <defaults>
</compile_context>

<pallas_src>
import functools

import jax
import jax.numpy as jnp
from jax.experimental import pallas as pl
from jax.experimental.pallas import tpu as pltpu

F_IN = 28 * 28          # 784 pixels
N_CLS = 10
H1, H2 = 256, 64


def _round_up(x, m):
    return (x + m - 1) // m * m


def _cdiv(a, b):
    return (a + b - 1) // b


def cae_kernel(x_ref, oh_ref,
               w1a_ref, w1b_ref, b1_ref,
               w2_ref, b2_ref,
               w3a_ref, w3b_ref, b3_ref,
               w4_ref, b4_ref,
               out_ref):
    x = x_ref[...].astype(jnp.bfloat16)     # (TB, 784) f32 -> bf16 in-kernel (VPU)
    oh = oh_ref[...]                        # (TB, 10)  bf16 one-hot labels

    # encoder[0]: Linear(784+10, 256) + ReLU   (torch.cat folded into split weights)
    h1 = (jnp.dot(x, w1a_ref[...], preferred_element_type=jnp.float32)
          + jnp.dot(oh, w1b_ref[...], preferred_element_type=jnp.float32)
          + b1_ref[...])
    h1 = jnp.maximum(h1, 0.0).astype(jnp.bfloat16)

    # encoder[2]: Linear(256, 64) + ReLU
    enc = jnp.dot(h1, w2_ref[...], preferred_element_type=jnp.float32) + b2_ref[...]
    enc = jnp.maximum(enc, 0.0).astype(jnp.bfloat16)

    # decoder[0]: Linear(64+10, 256) + ReLU    (torch.cat folded into split weights)
    h3 = (jnp.dot(enc, w3a_ref[...], preferred_element_type=jnp.float32)
          + jnp.dot(oh, w3b_ref[...], preferred_element_type=jnp.float32)
          + b3_ref[...])
    h3 = jnp.maximum(h3, 0.0).astype(jnp.bfloat16)

    # decoder[2]: Linear(256, 784) + Sigmoid (EUP exp + EUP approx reciprocal)
    logits = jnp.dot(h3, w4_ref[...], preferred_element_type=jnp.float32) + b4_ref[...]
    out_ref[...] = pl.reciprocal(1.0 + jnp.exp(-logits), approx=True)


@functools.partial(jax.jit, static_argnames=("tb",))
def conditional_autoencoder_forward(x, labels, params, *, tb=1024):
    """x: (B, 1, 28, 28) f32, labels: (B,) int32 -> (B, 1, 28, 28) f32."""
    (w1a, w1b, b1, w2, b2, w3a, w3b, b3, w4, b4) = params

    B = x.shape[0]
    x_flat = x.reshape(B, F_IN)                                   # f32, view only
    onehot = jax.nn.one_hot(labels, N_CLS, dtype=jnp.bfloat16)    # (B, 10) tiny op

    # Balanced batch tiles (multiple of 8 sublanes), at least 2 grid steps so
    # both v7x TensorCores get work; pad waste < 8 * num_tiles rows and is zero
    # for common batch sizes (128/256/512/1024/...).
    num_tiles = max(_cdiv(B, tb), 2)
    tb_eff = _round_up(_cdiv(B, num_tiles), 8)
    b_pad = tb_eff * num_tiles
    if b_pad != B:
        x_flat = jnp.pad(x_flat, ((0, b_pad - B), (0, 0)))
        onehot = jnp.pad(onehot, ((0, b_pad - B), (0, 0)))

    grid = (num_tiles,)

    def tiled(feat):
        return pl.BlockSpec((tb_eff, feat), lambda i: (i, 0))

    def resident(arr):
        # Constant block index across the grid -> single-buffer (saves VMEM,
        # drops dead re-DMA descriptors).
        return pl.BlockSpec(arr.shape, lambda i: (0, 0),
                            pipeline_mode=pl.Buffered(1))

    in_specs = [
        tiled(F_IN),             # x (f32)
        tiled(N_CLS),            # onehot (bf16)
        resident(w1a), resident(w1b), resident(b1),
        resident(w2), resident(b2),
        resident(w3a), resident(w3b), resident(b3),
        resident(w4), resident(b4),
    ]
    out_specs = tiled(F_IN)

    flops = 2 * b_pad * (F_IN * H1 + N_CLS * H1 + H1 * H2
                         + H2 * H1 + N_CLS * H1 + H1 * F_IN)
    weight_bytes = sum(int(w.size) * w.dtype.itemsize for w in params)
    bytes_accessed = (b_pad * F_IN * 4            # x in (f32)
                      + b_pad * N_CLS * 2         # onehot in (bf16)
                      + b_pad * F_IN * 4          # out (f32)
                      + weight_bytes)

    out = pl.pallas_call(
        cae_kernel,
        out_shape=jax.ShapeDtypeStruct((b_pad, F_IN), jnp.float32),
        grid=grid,
        in_specs=in_specs,
        out_specs=out_specs,
        compiler_params=pltpu.CompilerParams(
            dimension_semantics=("parallel",),
            vmem_limit_bytes=48 * 1024 * 1024),
        cost_estimate=pl.CostEstimate(
            flops=flops,
            transcendentals=2 * b_pad * F_IN,     # sigmoid = exp + reciprocal
            bytes_accessed=bytes_accessed),
    )(x_flat, onehot, w1a, w1b, b1, w2, b2, w3a, w3b, b3, w4, b4)

    # Metadata-only view when b_pad == B (common training batch sizes).
    return out[:B].reshape(B, 1, 28, 28)


def init_params(key):
    """Deterministic params matching the nn.Linear shapes of the module.

    Weights are stored transposed relative to torch ((fan_in, fan_out)) so the
    kernel computes x @ W + b directly, pre-split at the torch.cat boundaries
    and cast to bf16 (MXU-native).  Biases stay f32 (added to the f32 accum).
    """
    def linear(key, fan_in, fan_out):
        kw, kb = jax.random.split(key)
        bound = 1.0 / jnp.sqrt(float(fan_in))
        w = jax.random.uniform(kw, (fan_in, fan_out), jnp.float32, -bound, bound)
        b = jax.random.uniform(kb, (1, fan_out), jnp.float32, -bound, bound)
        return w, b

    k1, k2, k3, k4 = jax.random.split(key, 4)
    w1, b1 = linear(k1, F_IN + N_CLS, H1)    # encoder[0]
    w2, b2 = linear(k2, H1, H2)              # encoder[2]
    w3, b3 = linear(k3, H2 + N_CLS, H1)      # decoder[0]
    w4, b4 = linear(k4, H1, F_IN)            # decoder[2]

    # Split at the cat boundaries: cat(x, oh) @ W1 == x @ W1[:784] + oh @ W1[784:].
    w1a, w1b = w1[:F_IN], w1[F_IN:]
    w3a, w3b = w3[:H2], w3[H2:]

    bf = lambda a: a.astype(jnp.bfloat16)
    return (bf(w1a), bf(w1b), b1, bf(w2), b2, bf(w3a), bf(w3b), b3, bf(w4), b4)


def reference_forward(x, labels, params):
    """Pure-JAX reference mirroring the kernel math (bf16 matmuls, f32 accum)."""
    (w1a, w1b, b1, w2, b2, w3a, w3b, b3, w4, b4) = params
    B = x.shape[0]
    xf = x.reshape(B, F_IN).astype(jnp.bfloat16)
    oh = jax.nn.one_hot(labels, N_CLS, dtype=jnp.bfloat16)
    h1 = jnp.maximum(jnp.dot(xf, w1a, preferred_element_type=jnp.float32)
                     + jnp.dot(oh, w1b, preferred_element_type=jnp.float32) + b1,
                     0.0).astype(jnp.bfloat16)
    enc = jnp.maximum(jnp.dot(h1, w2, preferred_element_type=jnp.float32) + b2,
                      0.0).astype(jnp.bfloat16)
    h3 = jnp.maximum(jnp.dot(enc, w3a, preferred_element_type=jnp.float32)
                     + jnp.dot(oh, w3b, preferred_element_type=jnp.float32) + b3,
                     0.0).astype(jnp.bfloat16)
    logits = jnp.dot(h3, w4, preferred_element_type=jnp.float32) + b4
    return jax.nn.sigmoid(logits).reshape(B, 1, 28, 28)


if __name__ == "__main__":
    key = jax.random.PRNGKey(0)
    k_params, k_x, k_lab = jax.random.split(key, 3)

    params = init_params(k_params)

    B = 2
    x = jax.random.uniform(k_x, (B, 1, 28, 28), jnp.float32)
    labels = jax.random.randint(k_lab, (B,), 0, 10, dtype=jnp.int32)

    out = conditional_autoencoder_forward(x, labels, params)
    out = jax.block_until_ready(out)

    assert out.shape == (B, 1, 28, 28), out.shape
    assert out.dtype == jnp.float32, out.dtype
    # sigmoid via approx reciprocal: allow a tiny tolerance beyond [0, 1]
    assert bool(jnp.all((out >= -1e-3) & (out <= 1.0 + 1e-3)))

    ref = reference_forward(x, labels, params)
    assert bool(jnp.allclose(out, ref, atol=5e-2)), float(jnp.max(jnp.abs(out - ref)))

    print("KERNEL_OK")
</pallas_src>

<mosaic_0001>
module attributes {stable_mosaic.version = 11 : i64} {
  func.func @cae_kernel(%arg0: i32, %arg1: memref<8x784xf32, #tpu.memory_space<vmem>>, %arg2: memref<8x10xbf16, #tpu.memory_space<vmem>>, %arg3: memref<784x256xbf16, #tpu.memory_space<vmem>>, %arg4: memref<10x256xbf16, #tpu.memory_space<vmem>>, %arg5: memref<1x256xf32, #tpu.memory_space<vmem>>, %arg6: memref<256x64xbf16, #tpu.memory_space<vmem>>, %arg7: memref<1x64xf32, #tpu.memory_space<vmem>>, %arg8: memref<64x256xbf16, #tpu.memory_space<vmem>>, %arg9: memref<10x256xbf16, #tpu.memory_space<vmem>>, %arg10: memref<1x256xf32, #tpu.memory_space<vmem>>, %arg11: memref<256x784xbf16, #tpu.memory_space<vmem>>, %arg12: memref<1x784xf32, #tpu.memory_space<vmem>>, %arg13: memref<8x784xf32, #tpu.memory_space<vmem>>) attributes {dimension_semantics = [#tpu.dimension_semantics<parallel>], iteration_bounds = array<i64: 2>, scalar_prefetch = 0 : i64, scratch_operands = 0 : i64, tpu.core_type = #tpu.core_type<tc>, window_params = [{transform_indices = @transform_0, window_bounds = array<i64: 8, 784>}, {transform_indices = @transform_1, window_bounds = array<i64: 8, 10>}, {pipeline_mode = #tpu.pipeline_mode<synchronous>, transform_indices = @transform_2, window_bounds = array<i64: 784, 256>}, {pipeline_mode = #tpu.pipeline_mode<synchronous>, transform_indices = @transform_3, window_bounds = array<i64: 10, 256>}, {pipeline_mode = #tpu.pipeline_mode<synchronous>, transform_indices = @transform_4, window_bounds = array<i64: 1, 256>}, {pipeline_mode = #tpu.pipeline_mode<synchronous>, transform_indices = @transform_5, window_bounds = array<i64: 256, 64>}, {pipeline_mode = #tpu.pipeline_mode<synchronous>, transform_indices = @transform_6, window_bounds = array<i64: 1, 64>}, {pipeline_mode = #tpu.pipeline_mode<synchronous>, transform_indices = @transform_7, window_bounds = array<i64: 64, 256>}, {pipeline_mode = #tpu.pipeline_mode<synchronous>, transform_indices = @transform_8, window_bounds = array<i64: 10, 256>}, {pipeline_mode = #tpu.pipeline_mode<synchronous>, transform_indices = @transform_9, window_bounds = array<i64: 1, 256>}, {pipeline_mode = #tpu.pipeline_mode<synchronous>, transform_indices = @transform_10, window_bounds = array<i64: 256, 784>}, {pipeline_mode = #tpu.pipeline_mode<synchronous>, transform_indices = @transform_11, window_bounds = array<i64: 1, 784>}, {transform_indices = @transform_12, window_bounds = array<i64: 8, 784>}]} {
    %c0 = arith.constant 0 : index
    %c0_0 = arith.constant 0 : index
    %0 = vector.load %arg1[%c0, %c0_0] : memref<8x784xf32, #tpu.memory_space<vmem>>, vector<8x784xf32>
    %1 = arith.truncf %0 : vector<8x784xf32> to vector<8x784xbf16>
    %c0_1 = arith.constant 0 : index
    %c0_2 = arith.constant 0 : index
    %2 = vector.load %arg2[%c0_1, %c0_2] : memref<8x10xbf16, #tpu.memory_space<vmem>>, vector<8x10xbf16>
    %c0_3 = arith.constant 0 : index
    %c0_4 = arith.constant 0 : index
    %3 = vector.load %arg3[%c0_3, %c0_4] : memref<784x256xbf16, #tpu.memory_space<vmem>>, vector<784x256xbf16>
    %cst = arith.constant dense<0.000000e+00> : vector<8x256xf32>
    %4 = tpu.matmul %1, %3, %cst {dimension_numbers = #tpu.dot_dimension_numbers<[1], [0], [0], [1], [0, 0, 1, 1], [], []>} : vector<8x784xbf16>, vector<784x256xbf16>, vector<8x256xf32> -> vector<8x256xf32>
    %c0_5 = arith.constant 0 : index
    %c0_6 = arith.constant 0 : index
    %5 = vector.load %arg4[%c0_5, %c0_6] : memref<10x256xbf16, #tpu.memory_space<vmem>>, vector<10x256xbf16>
    %cst_7 = arith.constant dense<0.000000e+00> : vector<8x256xf32>
    %6 = tpu.matmul %2, %5, %cst_7 {dimension_numbers = #tpu.dot_dimension_numbers<[1], [0], [0], [1], [0, 0, 1, 1], [], []>} : vector<8x10xbf16>, vector<10x256xbf16>, vector<8x256xf32> -> vector<8x256xf32>
    %7 = arith.addf %4, %6 : vector<8x256xf32>
    %c0_8 = arith.constant 0 : index
    %c0_9 = arith.constant 0 : index
    %8 = vector.load %arg5[%c0_8, %c0_9] : memref<1x256xf32, #tpu.memory_space<vmem>>, vector<1x256xf32>
    %9 = vector.broadcast %8 : vector<1x256xf32> to vector<8x256xf32>
    %10 = arith.addf %7, %9 : vector<8x256xf32>
    %cst_10 = arith.constant 0.000000e+00 : f32
    %11 = vector.broadcast %cst_10 : f32 to vector<8x256xf32>
    %12 = arith.maximumf %10, %11 : vector<8x256xf32>
    %13 = arith.truncf %12 : vector<8x256xf32> to vector<8x256xbf16>
    %c0_11 = arith.constant 0 : index
    %c0_12 = arith.constant 0 : index
    %14 = vector.load %arg6[%c0_11, %c0_12] : memref<256x64xbf16, #tpu.memory_space<vmem>>, vector<256x64xbf16>
    %cst_13 = arith.constant dense<0.000000e+00> : vector<8x64xf32>
    %15 = tpu.matmul %13, %14, %cst_13 {dimension_numbers = #tpu.dot_dimension_numbers<[1], [0], [0], [1], [0, 0, 1, 1], [], []>} : vector<8x256xbf16>, vector<256x64xbf16>, vector<8x64xf32> -> vector<8x64xf32>
    %c0_14 = arith.constant 0 : index
    %c0_15 = arith.constant 0 : index
    %16 = vector.load %arg7[%c0_14, %c0_15] : memref<1x64xf32, #tpu.memory_space<vmem>>, vector<1x64xf32>
    %17 = vector.broadcast %16 : vector<1x64xf32> to vector<8x64xf32>
    %18 = arith.addf %15, %17 : vector<8x64xf32>
    %cst_16 = arith.constant 0.000000e+00 : f32
    %19 = vector.broadcast %cst_16 : f32 to vector<8x64xf32>
    %20 = arith.maximumf %18, %19 : vector<8x64xf32>
    %21 = arith.truncf %20 : vector<8x64xf32> to vector<8x64xbf16>
    %c0_17 = arith.constant 0 : index
    %c0_18 = arith.constant 0 : index
    %22 = vector.load %arg8[%c0_17, %c0_18] : memref<64x256xbf16, #tpu.memory_space<vmem>>, vector<64x256xbf16>
    %cst_19 = arith.constant dense<0.000000e+00> : vector<8x256xf32>
    %23 = tpu.matmul %21, %22, %cst_19 {dimension_numbers = #tpu.dot_dimension_numbers<[1], [0], [0], [1], [0, 0, 1, 1], [], []>} : vector<8x64xbf16>, vector<64x256xbf16>, vector<8x256xf32> -> vector<8x256xf32>
    %c0_20 = arith.constant 0 : index
    %c0_21 = arith.constant 0 : index
    %24 = vector.load %arg9[%c0_20, %c0_21] : memref<10x256xbf16, #tpu.memory_space<vmem>>, vector<10x256xbf16>
    %cst_22 = arith.constant dense<0.000000e+00> : vector<8x256xf32>
    %25 = tpu.matmul %2, %24, %cst_22 {dimension_numbers = #tpu.dot_dimension_numbers<[1], [0], [0], [1], [0, 0, 1, 1], [], []>} : vector<8x10xbf16>, vector<10x256xbf16>, vector<8x256xf32> -> vector<8x256xf32>
    %26 = arith.addf %23, %25 : vector<8x256xf32>
    %c0_23 = arith.constant 0 : index
    %c0_24 = arith.constant 0 : index
    %27 = vector.load %arg10[%c0_23, %c0_24] : memref<1x256xf32, #tpu.memory_space<vmem>>, vector<1x256xf32>
    %28 = vector.broadcast %27 : vector<1x256xf32> to vector<8x256xf32>
    %29 = arith.addf %26, %28 : vector<8x256xf32>
    %cst_25 = arith.constant 0.000000e+00 : f32
    %30 = vector.broadcast %cst_25 : f32 to vector<8x256xf32>
    %31 = arith.maximumf %29, %30 : vector<8x256xf32>
    %32 = arith.truncf %31 : vector<8x256xf32> to vector<8x256xbf16>
    %c0_26 = arith.constant 0 : index
    %c0_27 = arith.constant 0 : index
    %33 = vector.load %arg11[%c0_26, %c0_27] : memref<256x784xbf16, #tpu.memory_space<vmem>>, vector<256x784xbf16>
    %cst_28 = arith.constant dense<0.000000e+00> : vector<8x784xf32>
    %34 = tpu.matmul %32, %33, %cst_28 {dimension_numbers = #tpu.dot_dimension_numbers<[1], [0], [0], [1], [0, 0, 1, 1], [], []>} : vector<8x256xbf16>, vector<256x784xbf16>, vector<8x784xf32> -> vector<8x784xf32>
    %c0_29 = arith.constant 0 : index
    %c0_30 = arith.constant 0 : index
    %35 = vector.load %arg12[%c0_29, %c0_30] : memref<1x784xf32, #tpu.memory_space<vmem>>, vector<1x784xf32>
    %36 = vector.broadcast %35 : vector<1x784xf32> to vector<8x784xf32>
    %37 = arith.addf %34, %36 : vector<8x784xf32>
    %cst_31 = arith.constant 0.000000e+00 : f32
    %38 = vector.broadcast %cst_31 : f32 to vector<8x784xf32>
    %39 = arith.subf %38, %37 : vector<8x784xf32>
    %40 = math.exp %39 : vector<8x784xf32>
    %cst_32 = arith.constant 1.000000e+00 : f32
    %41 = vector.broadcast %cst_32 : f32 to vector<8x784xf32>
    %42 = arith.addf %41, %40 : vector<8x784xf32>
    %43 = tpu.reciprocal %42 {approx = true} : vector<8x784xf32> -> vector<8x784xf32>
    %c0_33 = arith.constant 0 : index
    %c0_34 = arith.constant 0 : index
    %44 = vector.load %arg13[%c0_33, %c0_34] : memref<8x784xf32, #tpu.memory_space<vmem>>, vector<8x784xf32>
    tpu.vector_store %arg13[%c0_33, %c0_34], %43 {strides = array<i32>} : memref<8x784xf32, #tpu.memory_space<vmem>>, vector<8x784xf32>,
    return
  }
  func.func @transform_0(%arg0: i32) -> (i32, i32) {
    %c0_i32 = arith.constant 0 : i32
    %c0_i32_0 = arith.constant 0 : i32
    return %arg0, %c0_i32 : i32, i32
  }
  func.func @transform_1(%arg0: i32) -> (i32, i32) {
    %c0_i32 = arith.constant 0 : i32
    %c0_i32_0 = arith.constant 0 : i32
    return %arg0, %c0_i32 : i32, i32
  }
  func.func @transform_2(%arg0: i32) -> (i32, i32) {
    %c0_i32 = arith.constant 0 : i32
    %c0_i32_0 = arith.constant 0 : i32
    %c0_i32_1 = arith.constant 0 : i32
    return %c0_i32, %c0_i32_0 : i32, i32
  }
  func.func @transform_3(%arg0: i32) -> (i32, i32) {
    %c0_i32 = arith.constant 0 : i32
    %c0_i32_0 = arith.constant 0 : i32
    %c0_i32_1 = arith.constant 0 : i32
    return %c0_i32, %c0_i32_0 : i32, i32
  }
  func.func @transform_4(%arg0: i32) -> (i32, i32) {
    %c0_i32 = arith.constant 0 : i32
    %c0_i32_0 = arith.constant 0 : i32
    %c0_i32_1 = arith.constant 0 : i32
    return %c0_i32, %c0_i32_0 : i32, i32
  }
  func.func @transform_5(%arg0: i32) -> (i32, i32) {
    %c0_i32 = arith.constant 0 : i32
    %c0_i32_0 = arith.constant 0 : i32
    %c0_i32_1 = arith.constant 0 : i32
    return %c0_i32, %c0_i32_0 : i32, i32
  }
  func.func @transform_6(%arg0: i32) -> (i32, i32) {
    %c0_i32 = arith.constant 0 : i32
    %c0_i32_0 = arith.constant 0 : i32
    %c0_i32_1 = arith.constant 0 : i32
    return %c0_i32, %c0_i32_0 : i32, i32
  }
  func.func @transform_7(%arg0: i32) -> (i32, i32) {
    %c0_i32 = arith.constant 0 : i32
    %c0_i32_0 = arith.constant 0 : i32
    %c0_i32_1 = arith.constant 0 : i32
    return %c0_i32, %c0_i32_0 : i32, i32
  }
  func.func @transform_8(%arg0: i32) -> (i32, i32) {
    %c0_i32 = arith.constant 0 : i32
    %c0_i32_0 = arith.constant 0 : i32
    %c0_i32_1 = arith.constant 0 : i32
    return %c0_i32, %c0_i32_0 : i32, i32
  }
  func.func @transform_9(%arg0: i32) -> (i32, i32) {
    %c0_i32 = arith.constant 0 : i32
    %c0_i32_0 = arith.constant 0 : i32
    %c0_i32_1 = arith.constant 0 : i32
    return %c0_i32, %c0_i32_0 : i32, i32
  }
  func.func @transform_10(%arg0: i32) -> (i32, i32) {
    %c0_i32 = arith.constant 0 : i32
    %c0_i32_0 = arith.constant 0 : i32
    %c0_i32_1 = arith.constant 0 : i32
    return %c0_i32, %c0_i32_0 : i32, i32
  }
  func.func @transform_11(%arg0: i32) -> (i32, i32) {
    %c0_i32 = arith.constant 0 : i32
    %c0_i32_0 = arith.constant 0 : i32
    %c0_i32_1 = arith.constant 0 : i32
    return %c0_i32, %c0_i32_0 : i32, i32
  }
  func.func @transform_12(%arg0: i32) -> (i32, i32) {
    %c0_i32 = arith.constant 0 : i32
    %c0_i32_0 = arith.constant 0 : i32
    return %arg0, %c0_i32 : i32, i32
  }
}

</mosaic_0001>

<llo_original>
// kernel: conditional_autoencoder_forward.1
$region0: #{conditional_autoencoder_forward.1}
  #allocation0 [shape = 'u32[]', space=smem, size = 0x4, offset = 0x4, fixed_abs, tag = 'smem constant byte address 0x4 - core index']
  #allocation1 [shape = 'u32[144,128]{1,0:T(1,128)}', space=vmem, size = 0x12000, scoped, tag = 'internal scratch']
  %s0 = inlined_call_operand.vmem [shape: f32[16,784], index: 0, kind: input, shape index: {}]
  %s1 = inlined_call_operand.vmem [shape: bf16[16,10], index: 1, kind: input, shape index: {}]
  %s2 = inlined_call_operand.vmem [shape: bf16[784,256], index: 2, kind: input, shape index: {}]
  %s3 = inlined_call_operand.vmem [shape: bf16[10,256], index: 3, kind: input, shape index: {}]
  %s4 = inlined_call_operand.vmem [shape: f32[1,256], index: 4, kind: input, shape index: {}]
  %s5 = inlined_call_operand.vmem [shape: bf16[256,64], index: 5, kind: input, shape index: {}]
  %s6 = inlined_call_operand.vmem [shape: f32[1,64], index: 6, kind: input, shape index: {}]
  %s7 = inlined_call_operand.vmem [shape: bf16[64,256], index: 7, kind: input, shape index: {}]
  %s8 = inlined_call_operand.vmem [shape: bf16[10,256], index: 8, kind: input, shape index: {}]
  %s9 = inlined_call_operand.vmem [shape: f32[1,256], index: 9, kind: input, shape index: {}]
  %s10 = inlined_call_operand.vmem [shape: bf16[256,784], index: 10, kind: input, shape index: {}]
  %s11 = inlined_call_operand.vmem [shape: f32[1,784], index: 11, kind: input, shape index: {}]
  %s12 = inlined_call_operand.vmem [shape: f32[16,784], index: 12, kind: output, shape index: {}]
  %s13 = sld [smem:[#allocation0]]
  $region81: #{conditional_autoencoder_forward.1} parent=0
    _
  %s15 = ssub.s32 1, %s13
  %s16 = scalar_select 0, %s15, %s13
  loop: start=0, step=1, limit=4
  $region2: #{conditional_autoencoder_forward.1} parent=0 // loop_pre_header
    _
  $region3: #{conditional_autoencoder_forward.1} parent=0 // loop_header
    %s18 = sphi 0, %s22
    %p19 = scmp.ge.s32.totalorder %s18, 4
    %s28 = sphi 0, %s30
    %s31 = sphi 0, %s28
    %s32 = sphi 0, %s31
    %s48 = sphi 0, %s32
    %s54 = sphi 0, %s56
    %s57 = sphi 0, %s54
    %s58 = sphi 0, %s57
    %s74 = sphi 0, %s58
    %s78 = sphi 0, %s78
    %s80 = sphi 0, %s78
    %s81 = sphi 0, %s80
    %s95 = sphi 0, %s81
    %s99 = sphi 0, %s99
    %s101 = sphi 0, %s99
    %s102 = sphi 0, %s101
    %s116 = sphi 0, %s102
    %s120 = sphi 0, %s120
    %s122 = sphi 0, %s120
    %s123 = sphi 0, %s122
    %s137 = sphi 0, %s123
    %s141 = sphi 0, %s141
    %s143 = sphi 0, %s141
    %s144 = sphi 0, %s143
    %s158 = sphi 0, %s144
    %s162 = sphi 0, %s162
    %s164 = sphi 0, %s162
    %s165 = sphi 0, %s164
    %s179 = sphi 0, %s165
    %s183 = sphi 0, %s183
    %s185 = sphi 0, %s183
    %s186 = sphi 0, %s185
    %s200 = sphi 0, %s186
    %s204 = sphi 0, %s204
    %s206 = sphi 0, %s204
    %s207 = sphi 0, %s206
    %s221 = sphi 0, %s207
    %s225 = sphi 0, %s225
    %s227 = sphi 0, %s225
    %s228 = sphi 0, %s227
    %s242 = sphi 0, %s228
    %s246 = sphi 0, %s246
    %s248 = sphi 0, %s246
    %s249 = sphi 0, %s248
    %s263 = sphi 0, %s249
    %s267 = sphi 0, %s267
    %s269 = sphi 0, %s267
    %s270 = sphi 0, %s269
    %s284 = sphi 0, %s270
    %s290 = sphi 0, %s292
    %s293 = sphi 0, %s290
    %s294 = sphi 0, %s293
    %s310 = sphi 0, %s294
  $region4: #{conditional_autoencoder_forward.1} parent=0 // loop_header_branch
    %21 = sbr.rel (%p19) target = $region8
  $region5: #{conditional_autoencoder_forward.1} parent=0 // loop_body
    %s23 = ssub.s32 %s18, 1
    %s24 = ssub.s32 %s18, 2
    %s25 = sadd.s32 %s18, 1
    %s26 = ssub.s32 %s18, %s25
    %p27 = scmp.eq.s32.totalorder %s26, 0
    %s29 = sadd.s32 %s28, 1
    %s30 = scalar_select %p27, %s28, %s29
    %p33 = pneg %p27
    %p34 = scmp.eq.s32.totalorder %s18, 1
    %p35 = por %p33, %p34
    %p36 = scmp.ne.s32.totalorder %s28, %s31
    %p37 = scmp.eq.s32.totalorder %s18, 0
    %p38 = por %p36, %p37
    %p39 = scmp.ne.s32.totalorder %s28, %s31
    %p40 = scmp.eq.s32.totalorder %s23, 1
    %p41 = por %p39, %p40
    %p42 = scmp.ne.s32.totalorder %s31, %s32
    %p43 = scmp.eq.s32.totalorder %s23, 0
    %p44 = por %p42, %p43
    %p45 = scmp.ne.s32.totalorder %s31, %s32
    %p46 = scmp.eq.s32.totalorder %s24, 1
    %p47 = por %p45, %p46
    %p49 = scmp.ne.s32.totalorder %s32, %s48
    %p50 = scmp.eq.s32.totalorder %s24, 0
    %p51 = por %p49, %p50
    %s52 = ssub.s32 %s18, %s25
    %p53 = scmp.eq.s32.totalorder %s52, 0
    %s55 = sadd.s32 %s54, 1
    %s56 = scalar_select %p53, %s54, %s55
    %p59 = pneg %p53
    %p60 = scmp.eq.s32.totalorder %s18, 1
    %p61 = por %p59, %p60
    %p62 = scmp.ne.s32.totalorder %s54, %s57
    %p63 = scmp.eq.s32.totalorder %s18, 0
    %p64 = por %p62, %p63
    %p65 = scmp.ne.s32.totalorder %s54, %s57
    %p66 = scmp.eq.s32.totalorder %s23, 1
    %p67 = por %p65, %p66
    %p68 = scmp.ne.s32.totalorder %s57, %s58
    %p69 = scmp.eq.s32.totalorder %s23, 0
    %p70 = por %p68, %p69
    %p71 = scmp.ne.s32.totalorder %s57, %s58
    %p72 = scmp.eq.s32.totalorder %s24, 1
    %p73 = por %p71, %p72
    %p75 = scmp.ne.s32.totalorder %s58, %s74
    %p76 = scmp.eq.s32.totalorder %s24, 0
    %p77 = por %p75, %p76
    %s79 = sadd.s32 %s78, 1
    %p82 = scmp.eq.s32.totalorder %s18, 1
    %p83 = scmp.ne.s32.totalorder %s78, %s80
    %p84 = scmp.eq.s32.totalorder %s18, 0
    %p85 = por %p83, %p84
    %p86 = scmp.ne.s32.totalorder %s78, %s80
    %p87 = scmp.eq.s32.totalorder %s23, 1
    %p88 = por %p86, %p87
    %p89 = scmp.ne.s32.totalorder %s80, %s81
    %p90 = scmp.eq.s32.totalorder %s23, 0
    %p91 = por %p89, %p90
    %p92 = scmp.ne.s32.totalorder %s80, %s81
    %p93 = scmp.eq.s32.totalorder %s24, 1
    %p94 = por %p92, %p93
    %p96 = scmp.ne.s32.totalorder %s81, %s95
    %p97 = scmp.eq.s32.totalorder %s24, 0
    %p98 = por %p96, %p97
    %s100 = sadd.s32 %s99, 1
    %p103 = scmp.eq.s32.totalorder %s18, 1
    %p104 = scmp.ne.s32.totalorder %s99, %s101
    %p105 = scmp.eq.s32.totalorder %s18, 0
    %p106 = por %p104, %p105
    %p107 = scmp.ne.s32.totalorder %s99, %s101
    %p108 = scmp.eq.s32.totalorder %s23, 1
    %p109 = por %p107, %p108
    %p110 = scmp.ne.s32.totalorder %s101, %s102
    %p111 = scmp.eq.s32.totalorder %s23, 0
    %p112 = por %p110, %p111
    %p113 = scmp.ne.s32.totalorder %s101, %s102
    %p114 = scmp.eq.s32.totalorder %s24, 1
    %p115 = por %p113, %p114
    %p117 = scmp.ne.s32.totalorder %s102, %s116
    %p118 = scmp.eq.s32.totalorder %s24, 0
    %p119 = por %p117, %p118
    %s121 = sadd.s32 %s120, 1
    %p124 = scmp.eq.s32.totalorder %s18, 1
    %p125 = scmp.ne.s32.totalorder %s120, %s122
    %p126 = scmp.eq.s32.totalorder %s18, 0
    %p127 = por %p125, %p126
    %p128 = scmp.ne.s32.totalorder %s120, %s122
    %p129 = scmp.eq.s32.totalorder %s23, 1
    %p130 = por %p128, %p129
    %p131 = scmp.ne.s32.totalorder %s122, %s123
    %p132 = scmp.eq.s32.totalorder %s23, 0
    %p133 = por %p131, %p132
    %p134 = scmp.ne.s32.totalorder %s122, %s123
    %p135 = scmp.eq.s32.totalorder %s24, 1
    %p136 = por %p134, %p135
    %p138 = scmp.ne.s32.totalorder %s123, %s137
    %p139 = scmp.eq.s32.totalorder %s24, 0
    %p140 = por %p138, %p139
    %s142 = sadd.s32 %s141, 1
    %p145 = scmp.eq.s32.totalorder %s18, 1
    %p146 = scmp.ne.s32.totalorder %s141, %s143
    %p147 = scmp.eq.s32.totalorder %s18, 0
    %p148 = por %p146, %p147
    %p149 = scmp.ne.s32.totalorder %s141, %s143
    %p150 = scmp.eq.s32.totalorder %s23, 1
    %p151 = por %p149, %p150
    %p152 = scmp.ne.s32.totalorder %s143, %s144
    %p153 = scmp.eq.s32.totalorder %s23, 0
    %p154 = por %p152, %p153
    %p155 = scmp.ne.s32.totalorder %s143, %s144
    %p156 = scmp.eq.s32.totalorder %s24, 1
    %p157 = por %p155, %p156
    %p159 = scmp.ne.s32.totalorder %s144, %s158
    %p160 = scmp.eq.s32.totalorder %s24, 0
    %p161 = por %p159, %p160
    %s163 = sadd.s32 %s162, 1
    %p166 = scmp.eq.s32.totalorder %s18, 1
    %p167 = scmp.ne.s32.totalorder %s162, %s164
    %p168 = scmp.eq.s32.totalorder %s18, 0
    %p169 = por %p167, %p168
    %p170 = scmp.ne.s32.totalorder %s162, %s164
    %p171 = scmp.eq.s32.totalorder %s23, 1
    %p172 = por %p170, %p171
    %p173 = scmp.ne.s32.totalorder %s164, %s165
    %p174 = scmp.eq.s32.totalorder %s23, 0
    %p175 = por %p173, %p174
    %p176 = scmp.ne.s32.totalorder %s164, %s165
    %p177 = scmp.eq.s32.totalorder %s24, 1
    %p178 = por %p176, %p177
    %p180 = scmp.ne.s32.totalorder %s165, %s179
    %p181 = scmp.eq.s32.totalorder %s24, 0
    %p182 = por %p180, %p181
    %s184 = sadd.s32 %s183, 1
    %p187 = scmp.eq.s32.totalorder %s18, 1
    %p188 = scmp.ne.s32.totalorder %s183, %s185
    %p189 = scmp.eq.s32.totalorder %s18, 0
    %p190 = por %p188, %p189
    %p191 = scmp.ne.s32.totalorder %s183, %s185
    %p192 = scmp.eq.s32.totalorder %s23, 1
    %p193 = por %p191, %p192
    %p194 = scmp.ne.s32.totalorder %s185, %s186
    %p195 = scmp.eq.s32.totalorder %s23, 0
    %p196 = por %p194, %p195
    %p197 = scmp.ne.s32.totalorder %s185, %s186
    %p198 = scmp.eq.s32.totalorder %s24, 1
    %p199 = por %p197, %p198
    %p201 = scmp.ne.s32.totalorder %s186, %s200
    %p202 = scmp.eq.s32.totalorder %s24, 0
    %p203 = por %p201, %p202
    %s205 = sadd.s32 %s204, 1
    %p208 = scmp.eq.s32.totalorder %s18, 1
    %p209 = scmp.ne.s32.totalorder %s204, %s206
    %p210 = scmp.eq.s32.totalorder %s18, 0
    %p211 = por %p209, %p210
    %p212 = scmp.ne.s32.totalorder %s204, %s206
    %p213 = scmp.eq.s32.totalorder %s23, 1
    %p214 = por %p212, %p213
    %p215 = scmp.ne.s32.totalorder %s206, %s207
    %p216 = scmp.eq.s32.totalorder %s23, 0
    %p217 = por %p215, %p216
    %p218 = scmp.ne.s32.totalorder %s206, %s207
    %p219 = scmp.eq.s32.totalorder %s24, 1
    %p220 = por %p218, %p219
    %p222 = scmp.ne.s32.totalorder %s207, %s221
    %p223 = scmp.eq.s32.totalorder %s24, 0
    %p224 = por %p222, %p223
    %s226 = sadd.s32 %s225, 1
    %p229 = scmp.eq.s32.totalorder %s18, 1
    %p230 = scmp.ne.s32.totalorder %s225, %s227
    %p231 = scmp.eq.s32.totalorder %s18, 0
    %p232 = por %p230, %p231
    %p233 = scmp.ne.s32.totalorder %s225, %s227
    %p234 = scmp.eq.s32.totalorder %s23, 1
    %p235 = por %p233, %p234
    %p236 = scmp.ne.s32.totalorder %s227, %s228
    %p237 = scmp.eq.s32.totalorder %s23, 0
    %p238 = por %p236, %p237
    %p239 = scmp.ne.s32.totalorder %s227, %s228
    %p240 = scmp.eq.s32.totalorder %s24, 1
    %p241 = por %p239, %p240
    %p243 = scmp.ne.s32.totalorder %s228, %s242
    %p244 = scmp.eq.s32.totalorder %s24, 0
    %p245 = por %p243, %p244
    %s247 = sadd.s32 %s246, 1
    %p250 = scmp.eq.s32.totalorder %s18, 1
    %p251 = scmp.ne.s32.totalorder %s246, %s248
    %p252 = scmp.eq.s32.totalorder %s18, 0
    %p253 = por %p251, %p252
    %p254 = scmp.ne.s32.totalorder %s246, %s248
    %p255 = scmp.eq.s32.totalorder %s23, 1
    %p256 = por %p254, %p255
    %p257 = scmp.ne.s32.totalorder %s248, %s249
    %p258 = scmp.eq.s32.totalorder %s23, 0
    %p259 = por %p257, %p258
    %p260 = scmp.ne.s32.totalorder %s248, %s249
    %p261 = scmp.eq.s32.totalorder %s24, 1
    %p262 = por %p260, %p261
    %p264 = scmp.ne.s32.totalorder %s249, %s263
    %p265 = scmp.eq.s32.totalorder %s24, 0
    %p266 = por %p264, %p265
    %s268 = sadd.s32 %s267, 1
    %p271 = scmp.eq.s32.totalorder %s18, 1
    %p272 = scmp.ne.s32.totalorder %s267, %s269
    %p273 = scmp.eq.s32.totalorder %s18, 0
    %p274 = por %p272, %p273
    %p275 = scmp.ne.s32.totalorder %s267, %s269
    %p276 = scmp.eq.s32.totalorder %s23, 1
    %p277 = por %p275, %p276
    %p278 = scmp.ne.s32.totalorder %s269, %s270
    %p279 = scmp.eq.s32.totalorder %s23, 0
    %p280 = por %p278, %p279
    %p281 = scmp.ne.s32.totalorder %s269, %s270
    %p282 = scmp.eq.s32.totalorder %s24, 1
    %p283 = por %p281, %p282
    %p285 = scmp.ne.s32.totalorder %s270, %s284
    %p286 = scmp.eq.s32.totalorder %s24, 0
    %p287 = por %p285, %p286
    %s288 = ssub.s32 %s18, %s25
    %p289 = scmp.eq.s32.totalorder %s288, 0
    %s291 = sadd.s32 %s290, 1
    %s292 = scalar_select %p289, %s290, %s291
    %p295 = pneg %p289
    %p296 = scmp.eq.s32.totalorder %s18, 1
    %p297 = por %p295, %p296
    %p298 = scmp.ne.s32.totalorder %s290, %s293
    %p299 = scmp.eq.s32.totalorder %s18, 0
    %p300 = por %p298, %p299
    %p301 = scmp.ne.s32.totalorder %s290, %s293
    %p302 = scmp.eq.s32.totalorder %s23, 1
    %p303 = por %p301, %p302
    %p304 = scmp.ne.s32.totalorder %s293, %s294
    %p305 = scmp.eq.s32.totalorder %s23, 0
    %p306 = por %p304, %p305
    %p307 = scmp.ne.s32.totalorder %s293, %s294
    %p308 = scmp.eq.s32.totalorder %s24, 1
    %p309 = por %p307, %p308
    %p311 = scmp.ne.s32.totalorder %s294, %s310
    %p312 = scmp.eq.s32.totalorder %s24, 0
    %p313 = por %p311, %p312
    %p314 = scmp.le.s32.totalorder 1, %s18
    %p315 = scmp.lt.s32.totalorder %s18, 3
    %p316 = pnand %p314, %p315
    %p317 = pneg %p316
    // Predicated region
    $region9: #{conditional_autoencoder_forward.1} parent=5 // pred_check
      _
    $region10: #{conditional_autoencoder_forward.1} parent=5 // pred_check_branch
      %319 = sbr.rel (%p316) target = $region12
    $region11: #{conditional_autoencoder_forward.1} parent=5 // pred_region
      %s320 = ssub.s32 %s18, 1
      // Predicated region
      $region13: #{conditional_autoencoder_forward.1} parent=11 // pred_check
        %p321 = pneg %p91
      $region14: #{conditional_autoencoder_forward.1} parent=11 // pred_check_branch
        %323 = sbr.rel (%p321) target = $region16
      $region15: #{conditional_autoencoder_forward.1} parent=11 // pred_region
        _
      $region16: #{conditional_autoencoder_forward.1} parent=11 // pred_fallthru
        _
      // Predicated region
      $region17: #{conditional_autoencoder_forward.1} parent=11 // pred_check
        %p324 = pneg %p112
      $region18: #{conditional_autoencoder_forward.1} parent=11 // pred_check_branch
        %326 = sbr.rel (%p324) target = $region20
      $region19: #{conditional_autoencoder_forward.1} parent=11 // pred_region
        _
      $region20: #{conditional_autoencoder_forward.1} parent=11 // pred_fallthru
        _
      // Predicated region
      $region21: #{conditional_autoencoder_forward.1} parent=11 // pred_check
        %p327 = pneg %p133
      $region22: #{conditional_autoencoder_forward.1} parent=11 // pred_check_branch
        %329 = sbr.rel (%p327) target = $region24
      $region23: #{conditional_autoencoder_forward.1} parent=11 // pred_region
        _
      $region24: #{conditional_autoencoder_forward.1} parent=11 // pred_fallthru
        _
      // Predicated region
      $region25: #{conditional_autoencoder_forward.1} parent=11 // pred_check
        %p330 = pneg %p154
      $region26: #{conditional_autoencoder_forward.1} parent=11 // pred_check_branch
        %332 = sbr.rel (%p330) target = $region28
      $region27: #{conditional_autoencoder_forward.1} parent=11 // pred_region
        _
      $region28: #{conditional_autoencoder_forward.1} parent=11 // pred_fallthru
        _
      // Predicated region
      $region29: #{conditional_autoencoder_forward.1} parent=11 // pred_check
        %p333 = pneg %p175
      $region30: #{conditional_autoencoder_forward.1} parent=11 // pred_check_branch
        %335 = sbr.rel (%p333) target = $region32
      $region31: #{conditional_autoencoder_forward.1} parent=11 // pred_region
        _
      $region32: #{conditional_autoencoder_forward.1} parent=11 // pred_fallthru
        _
      // Predicated region
      $region33: #{conditional_autoencoder_forward.1} parent=11 // pred_check
        %p336 = pneg %p196
      $region34: #{conditional_autoencoder_forward.1} parent=11 // pred_check_branch
        %338 = sbr.rel (%p336) target = $region36
      $region35: #{conditional_autoencoder_forward.1} parent=11 // pred_region
        _
      $region36: #{conditional_autoencoder_forward.1} parent=11 // pred_fallthru
        _
      // Predicated region
      $region37: #{conditional_autoencoder_forward.1} parent=11 // pred_check
        %p339 = pneg %p217
      $region38: #{conditional_autoencoder_forward.1} parent=11 // pred_check_branch
        %341 = sbr.rel (%p339) target = $region40
      $region39: #{conditional_autoencoder_forward.1} parent=11 // pred_region
        _
      $region40: #{conditional_autoencoder_forward.1} parent=11 // pred_fallthru
        _
      // Predicated region
      $region41: #{conditional_autoencoder_forward.1} parent=11 // pred_check
        %p342 = pneg %p238
      $region42: #{conditional_autoencoder_forward.1} parent=11 // pred_check_branch
        %344 = sbr.rel (%p342) target = $region44
      $region43: #{conditional_autoencoder_forward.1} parent=11 // pred_region
        _
      $region44: #{conditional_autoencoder_forward.1} parent=11 // pred_fallthru
        _
      // Predicated region
      $region45: #{conditional_autoencoder_forward.1} parent=11 // pred_check
        %p345 = pneg %p259
      $region46: #{conditional_autoencoder_forward.1} parent=11 // pred_check_branch
        %347 = sbr.rel (%p345) target = $region48
      $region47: #{conditional_autoencoder_forward.1} parent=11 // pred_region
        _
      $region48: #{conditional_autoencoder_forward.1} parent=11 // pred_fallthru
        _
      // Predicated region
      $region49: #{conditional_autoencoder_forward.1} parent=11 // pred_check
        %p348 = pneg %p280
      $region50: #{conditional_autoencoder_forward.1} parent=11 // pred_check_branch
        %350 = sbr.rel (%p348) target = $region52
      $region51: #{conditional_autoencoder_forward.1} parent=11 // pred_region
        _
      $region52: #{conditional_autoencoder_forward.1} parent=11 // pred_fallthru
        _
    $region12: #{conditional_autoencoder_forward.1} parent=5 // pred_fallthru
      _
    %p351 = scmp.lt.s32.totalorder %s18, 2
    // Predicated region
    $region53: #{conditional_autoencoder_forward.1} parent=5 // pred_check
      %p352 = pneg %p351
    $region54: #{conditional_autoencoder_forward.1} parent=5 // pred_check_branch
      %354 = sbr.rel (%p352) target = $region56
    $region55: #{conditional_autoencoder_forward.1} parent=5 // pred_region
      // Predicated region
      $region57: #{conditional_autoencoder_forward.1} parent=55 // pred_check
        %p355 = pneg %p38
      $region58: #{conditional_autoencoder_forward.1} parent=55 // pred_check_branch
        %357 = sbr.rel (%p355) target = $region60
      $region59: #{conditional_autoencoder_forward.1} parent=55 // pred_region
        %p358 = scmp.lt.s32.totalorder %s18, 1
        %s359 = scalar_select %p358, %s18, 1
        %s360 = smul.addr %s359, 7
        %s361 = smul.addr %s360, 8
        %s362 = scalar_lea.vmem %s0, %s361
      $region60: #{conditional_autoencoder_forward.1} parent=55 // pred_fallthru
        _
      // Predicated region
      $region61: #{conditional_autoencoder_forward.1} parent=55 // pred_check
        %p363 = pneg %p64
      $region62: #{conditional_autoencoder_forward.1} parent=55 // pred_check_branch
        %365 = sbr.rel (%p363) target = $region64
      $region63: #{conditional_autoencoder_forward.1} parent=55 // pred_region
        %p366 = scmp.lt.s32.totalorder %s18, 1
        %s367 = scalar_select %p366, %s18, 1
        %s368 = smul.addr %s367, 4
        %s369 = scalar_lea.vmem %s1, %s368
      $region64: #{conditional_autoencoder_forward.1} parent=55 // pred_fallthru
        _
    $region56: #{conditional_autoencoder_forward.1} parent=5 // pred_fallthru
      _
    %p370 = scmp.le.s32.totalorder 1, %s18
    %p371 = scmp.lt.s32.totalorder %s18, 3
    %p372 = pnand %p370, %p371
    %p373 = pneg %p372
    // Predicated region
    $region65: #{conditional_autoencoder_forward.1} parent=5 // pred_check
      _
    $region66: #{conditional_autoencoder_forward.1} parent=5 // pred_check_branch
      %375 = sbr.rel (%p372) target = $region68
    $region67: #{conditional_autoencoder_forward.1} parent=5 // pred_region
      %s376 = ssub.s32 %s18, 1
      %p377 = scmp.lt.s32.totalorder %s23, 1
      %s378 = scalar_select %p377, %s23, 1
      %s379 = smul.addr %s378, 7
      %s380 = smul.addr %s379, 8
      %s381 = scalar_lea.vmem %s0, %s380
      %p382 = pneg %p44
      %p383 = pneg %p41
      %p384 = scmp.lt.s32.totalorder %s23, 1
      %s385 = scalar_select %p384, %s23, 1
      %s386 = smul.addr %s385, 4
      %s387 = scalar_lea.vmem %s1, %s386
      %p388 = pneg %p70
      %p389 = pneg %p67
      %p390 = pneg %p91
      %p391 = pneg %p88
      %p392 = pneg %p112
      %p393 = pneg %p109
      %p394 = pneg %p133
      %p395 = pneg %p130
      %p396 = pneg %p154
      %p397 = pneg %p151
      %p398 = pneg %p175
      %p399 = pneg %p172
      %p400 = pneg %p196
      %p401 = pneg %p193
      %p402 = pneg %p217
      %p403 = pneg %p214
      %p404 = pneg %p238
      %p405 = pneg %p235
      %p406 = pneg %p259
      %p407 = pneg %p256
      %p408 = pneg %p280
      %p409 = pneg %p277
      %p410 = pneg %p306
      %p411 = pneg %p303
      %p412 = scmp.lt.s32.totalorder %s23, 1
      %s413 = scalar_select %p412, %s23, 1
      %s414 = smul.addr %s413, 7
      %s415 = smul.addr %s414, 8
      %s416 = scalar_lea.vmem %s12, %s415
      %p417 = scmp.lt.s32.totalorder %s23, 1
      %s418 = scalar_select %p417, %s23, 1
      %s419 = smul.addr %s418, 7
      %s420 = smul.addr %s419, 8
      %s421 = scalar_lea.vmem %s0, %s420
      %p422 = scmp.lt.s32.totalorder %s23, 1
      %s423 = scalar_select %p422, %s23, 1
      %s424 = smul.addr %s423, 4
      %s425 = scalar_lea.vmem %s1, %s424
      %p426 = scmp.lt.s32.totalorder %s23, 1
      %s427 = scalar_select %p426, %s23, 1
      %s428 = smul.addr %s427, 7
      %s429 = smul.addr %s428, 8
      %s430 = scalar_lea.vmem %s12, %s429
      %v432 = vld [vmem:[%s421] sm:$0xff]
      %v433 = vld [vmem:[%s421 + $0x8] sm:$0xff]
      %v434 = vld [vmem:[%s421 + $0x10] sm:$0xff]
      %v435 = vld [vmem:[%s421 + $0x18] sm:$0xff]
      %v436 = vld [vmem:[%s421 + $0x20] sm:$0xff]
      %v437 = vld [vmem:[%s421 + $0x28] sm:$0xff]
      %v438 = vld [vmem:[%s421 + $0x30] sm:$0xff]
      %v439 = vpack.c.bf16 %v432, %v432
      %v440 = vpack.c.bf16 %v433, %v433
      %v441 = vpack.c.bf16 %v434, %v434
      %v442 = vpack.c.bf16 %v435, %v435
      %v443 = vpack.c.bf16 %v436, %v436
      %v444 = vpack.c.bf16 %v437, %v437
      %v445 = vpack.c.bf16 %v438, %v438
      %v446 = vld [vmem:[%s425] sm:$0xf]
      %v447 = vld [vmem:[%s2] sm:$0xff]
      %v448 = vld [vmem:[%s2 + $0x8] sm:$0xff]
      %v449 = vld [vmem:[%s2 + $0x10] sm:$0xff]
      %v450 = vld [vmem:[%s2 + $0x18] sm:$0xff]
      %v451 = vld [vmem:[%s2 + $0x20] sm:$0xff]
      %v452 = vld [vmem:[%s2 + $0x28] sm:$0xff]
      %v453 = vld [vmem:[%s2 + $0x30] sm:$0xff]
      %v454 = vld [vmem:[%s2 + $0x38] sm:$0xff]
      %v455 = vld [vmem:[%s2 + $0x40] sm:$0xff]
      %v456 = vld [vmem:[%s2 + $0x48] sm:$0xff]
      %v457 = vld [vmem:[%s2 + $0x50] sm:$0xff]
      %v458 = vld [vmem:[%s2 + $0x58] sm:$0xff]
      %v459 = vld [vmem:[%s2 + $0x60] sm:$0xff]
      %v460 = vld [vmem:[%s2 + $0x68] sm:$0xff]
      %v461 = vld [vmem:[%s2 + $0x70] sm:$0xff]
      %v462 = vld [vmem:[%s2 + $0x78] sm:$0xff]
      %v463 = vld [vmem:[%s2 + $0x80] sm:$0xff]
      %v464 = vld [vmem:[%s2 + $0x88] sm:$0xff]
      %v465 = vld [vmem:[%s2 + $0x90] sm:$0xff]
      %v466 = vld [vmem:[%s2 + $0x98] sm:$0xff]
      %v467 = vld [vmem:[%s2 + $0xa0] sm:$0xff]
      %v468 = vld [vmem:[%s2 + $0xa8] sm:$0xff]
      %v469 = vld [vmem:[%s2 + $0xb0] sm:$0xff]
      %v470 = vld [vmem:[%s2 + $0xb8] sm:$0xff]
      %v471 = vld [vmem:[%s2 + $0xc0] sm:$0xff]
      %v472 = vld [vmem:[%s2 + $0xc8] sm:$0xff]
      %v473 = vld [vmem:[%s2 + $0xd0] sm:$0xff]
      %v474 = vld [vmem:[%s2 + $0xd8] sm:$0xff]
      %v475 = vld [vmem:[%s2 + $0xe0] sm:$0xff]
      %v476 = vld [vmem:[%s2 + $0xe8] sm:$0xff]
      %v477 = vld [vmem:[%s2 + $0xf0] sm:$0xff]
      %v478 = vld [vmem:[%s2 + $0xf8] sm:$0xff]
      %v479 = vld [vmem:[%s2 + $0x100] sm:$0xff]
      %v480 = vld [vmem:[%s2 + $0x108] sm:$0xff]
      %v481 = vld [vmem:[%s2 + $0x110] sm:$0xff]
      %v482 = vld [vmem:[%s2 + $0x118] sm:$0xff]
      %v483 = vld [vmem:[%s2 + $0x120] sm:$0xff]
      %v484 = vld [vmem:[%s2 + $0x128] sm:$0xff]
      %v485 = vld [vmem:[%s2 + $0x130] sm:$0xff]
      %v486 = vld [vmem:[%s2 + $0x138] sm:$0xff]
      %v487 = vld [vmem:[%s2 + $0x140] sm:$0xff]
      %v488 = vld [vmem:[%s2 + $0x148] sm:$0xff]
      %v489 = vld [vmem:[%s2 + $0x150] sm:$0xff]
      %v490 = vld [vmem:[%s2 + $0x158] sm:$0xff]
      %v491 = vld [vmem:[%s2 + $0x160] sm:$0xff]
      %v492 = vld [vmem:[%s2 + $0x168] sm:$0xff]
      %v493 = vld [vmem:[%s2 + $0x170] sm:$0xff]
      %v494 = vld [vmem:[%s2 + $0x178] sm:$0xff]
      %v495 = vld [vmem:[%s2 + $0x180] sm:$0xff]
      %v496 = vld [vmem:[%s2 + $0x188] sm:$0xff]
      %v497 = vld [vmem:[%s2 + $0x190] sm:$0xff]
      %v498 = vld [vmem:[%s2 + $0x198] sm:$0xff]
      %v499 = vld [vmem:[%s2 + $0x1a0] sm:$0xff]
      %v500 = vld [vmem:[%s2 + $0x1a8] sm:$0xff]
      %v501 = vld [vmem:[%s2 + $0x1b0] sm:$0xff]
      %v502 = vld [vmem:[%s2 + $0x1b8] sm:$0xff]
      %v503 = vld [vmem:[%s2 + $0x1c0] sm:$0xff]
      %v504 = vld [vmem:[%s2 + $0x1c8] sm:$0xff]
      %v505 = vld [vmem:[%s2 + $0x1d0] sm:$0xff]
      %v506 = vld [vmem:[%s2 + $0x1d8] sm:$0xff]
      %v507 = vld [vmem:[%s2 + $0x1e0] sm:$0xff]
      %v508 = vld [vmem:[%s2 + $0x1e8] sm:$0xff]
      %v509 = vld [vmem:[%s2 + $0x1f0] sm:$0xff]
      %v510 = vld [vmem:[%s2 + $0x1f8] sm:$0xff]
      %v511 = vld [vmem:[%s2 + $0x200] sm:$0xff]
      %v512 = vld [vmem:[%s2 + $0x208] sm:$0xff]
      %v513 = vld [vmem:[%s2 + $0x210] sm:$0xff]
      %v514 = vld [vmem:[%s2 + $0x218] sm:$0xff]
      %v515 = vld [vmem:[%s2 + $0x220] sm:$0xff]
      %v516 = vld [vmem:[%s2 + $0x228] sm:$0xff]
      %v517 = vld [vmem:[%s2 + $0x230] sm:$0xff]
      %v518 = vld [vmem:[%s2 + $0x238] sm:$0xff]
      %v519 = vld [vmem:[%s2 + $0x240] sm:$0xff]
      %v520 = vld [vmem:[%s2 + $0x248] sm:$0xff]
      %v521 = vld [vmem:[%s2 + $0x250] sm:$0xff]
      %v522 = vld [vmem:[%s2 + $0x258] sm:$0xff]
      %v523 = vld [vmem:[%s2 + $0x260] sm:$0xff]
      %v524 = vld [vmem:[%s2 + $0x268] sm:$0xff]
      %v525 = vld [vmem:[%s2 + $0x270] sm:$0xff]
      %v526 = vld [vmem:[%s2 + $0x278] sm:$0xff]
      %v527 = vld [vmem:[%s2 + $0x280] sm:$0xff]
      %v528 = vld [vmem:[%s2 + $0x288] sm:$0xff]
      %v529 = vld [vmem:[%s2 + $0x290] sm:$0xff]
      %v530 = vld [vmem:[%s2 + $0x298] sm:$0xff]
      %v531 = vld [vmem:[%s2 + $0x2a0] sm:$0xff]
      %v532 = vld [vmem:[%s2 + $0x2a8] sm:$0xff]
      %v533 = vld [vmem:[%s2 + $0x2b0] sm:$0xff]
      %v534 = vld [vmem:[%s2 + $0x2b8] sm:$0xff]
      %v535 = vld [vmem:[%s2 + $0x2c0] sm:$0xff]
      %v536 = vld [vmem:[%s2 + $0x2c8] sm:$0xff]
      %v537 = vld [vmem:[%s2 + $0x2d0] sm:$0xff]
      %v538 = vld [vmem:[%s2 + $0x2d8] sm:$0xff]
      %v539 = vld [vmem:[%s2 + $0x2e0] sm:$0xff]
      %v540 = vld [vmem:[%s2 + $0x2e8] sm:$0xff]
      %v541 = vld [vmem:[%s2 + $0x2f0] sm:$0xff]
      %v542 = vld [vmem:[%s2 + $0x2f8] sm:$0xff]
      %v543 = vld [vmem:[%s2 + $0x300] sm:$0xff]
      %v544 = vld [vmem:[%s2 + $0x308] sm:$0xff]
      %v545 = vld [vmem:[%s3] sm:$0xff]
      %v546 = vld [vmem:[%s3 + $0x8] sm:$0x11]
      %v549 = vunpack.c.l.b16 %v545
      %v550 = vunpack.c.h.b16 %v545
      %v551 = vunpack.c.l.b16 %v546
      %v552 = vunpack.c.h.b16 %v546
      %v553 = vpack.c.b16 %v551, %v549
      %v554 = vpack.c.b16 %v552, %v550
      %vm555 = vcmask 80896
      %v557 = vsel %vm555, %v446, 0
      %vm559 = vcmask 1044480
      %v561 = vsel %vm559, %v553, 0
      %v564 = vsel %vm559, %v554, 0
      %566 = vmatprep.subr.bf16.mxu0 %v564
      %567 = vmatpush1.bf16.msra.mxu0 %v561
      %568 = vmatprep.subr.bf16.mxu0 0
      %569 = vmatpush1.bf16.msra.mxu0 0
      %570 = vmatprep.subr.bf16.mxu0 0
      %571 = vmatpush1.bf16.msra.mxu0 0
      %572 = vmatprep.subr.bf16.mxu0 0
      %573 = vmatpush1.bf16.msra.mxu0 0
      %574 = vmatprep.subr.bf16.mxu0 0
      %575 = vmatpush1.bf16.msra.mxu0 0
      %576 = vmatprep.subr.bf16.mxu0 0
      %577 = vmatpush1.bf16.msra.mxu0 0
      %578 = vmatprep.subr.bf16.mxu0 0
      %579 = vmatpush1.bf16.msra.mxu0 0
      %580 = vmatprep.subr.bf16.mxu0 0
      %581 = vmatpush1.bf16.msra.mxu0 0
      %582 = vmatprep.subr.bf16.mxu0 0
      %583 = vmatpush1.bf16.msra.mxu0 0
      %584 = vmatprep.subr.bf16.mxu0 0
      %585 = vmatpush1.bf16.msra.mxu0 0
      %586 = vmatprep.subr.bf16.mxu0 0
      %587 = vmatpush1.bf16.msra.mxu0 0
      %588 = vmatprep.subr.bf16.mxu0 0
      %589 = vmatpush1.bf16.msra.mxu0 0
      %590 = vmatprep.subr.bf16.mxu0 0
      %591 = vmatpush1.bf16.msra.mxu0 0
      %592 = vmatprep.subr.bf16.mxu0 0
      %593 = vmatpush1.bf16.msra.mxu0 0
      %594 = vmatprep.subr.bf16.mxu0 0
      %595 = vmatpush1.bf16.msra.mxu0 0
      %596 = vmatprep.subr.bf16.mxu0 0
      %597 = vmatpush1.bf16.msra.mxu0 0
      %598 = vmatprep.mubr.bf16.mxu0 0
      %599 = vmatmul.mubr.bf16.gmra.mrb[0].mxu0 %v557
      %v600 = vpop.f32.mrb[0].mxu0
      %v601 = vadd.f32 0.0, %v600
      %v602 = vpop.f32.mrb[0].mxu0
      %v603 = vadd.f32 0.0, %v602
      %v604 = vpop.f32.mrb[0].mxu0
      %v605 = vpop.f32.mrb[0].mxu0
      %606 = vdwg.mxu0
      %v705 = vunpack.c.l.b16 %v447
      %v706 = vunpack.c.h.b16 %v447
      %v707 = vunpack.c.l.b16 %v448
      %v708 = vunpack.c.h.b16 %v448
      %v709 = vunpack.c.l.b16 %v449
      %v710 = vunpack.c.h.b16 %v449
      %v711 = vunpack.c.l.b16 %v450
      %v712 = vunpack.c.h.b16 %v450
      %v713 = vunpack.c.l.b16 %v451
      %v714 = vunpack.c.h.b16 %v451
      %v715 = vunpack.c.l.b16 %v452
      %v716 = vunpack.c.h.b16 %v452
      %v717 = vunpack.c.l.b16 %v453
      %v718 = vunpack.c.h.b16 %v453
      %v719 = vunpack.c.l.b16 %v454
      %v720 = vunpack.c.h.b16 %v454
      %v721 = vunpack.c.l.b16 %v455
      %v722 = vunpack.c.h.b16 %v455
      %v723 = vunpack.c.l.b16 %v456
      %v724 = vunpack.c.h.b16 %v456
      %v725 = vunpack.c.l.b16 %v457
      %v726 = vunpack.c.h.b16 %v457
      %v727 = vunpack.c.l.b16 %v458
      %v728 = vunpack.c.h.b16 %v458
      %v729 = vunpack.c.l.b16 %v459
      %v730 = vunpack.c.h.b16 %v459
      %v731 = vunpack.c.l.b16 %v460
      %v732 = vunpack.c.h.b16 %v460
      %v733 = vunpack.c.l.b16 %v461
      %v734 = vunpack.c.h.b16 %v461
      %v735 = vunpack.c.l.b16 %v462
      %v736 = vunpack.c.h.b16 %v462
      %v737 = vunpack.c.l.b16 %v463
      %v738 = vunpack.c.h.b16 %v463
      %v739 = vunpack.c.l.b16 %v464
      %v740 = vunpack.c.h.b16 %v464
      %v741 = vunpack.c.l.b16 %v465
      %v742 = vunpack.c.h.b16 %v465
      %v743 = vunpack.c.l.b16 %v466
      %v744 = vunpack.c.h.b16 %v466
      %v745 = vunpack.c.l.b16 %v467
      %v746 = vunpack.c.h.b16 %v467
      %v747 = vunpack.c.l.b16 %v468
      %v748 = vunpack.c.h.b16 %v468
      %v749 = vunpack.c.l.b16 %v469
      %v750 = vunpack.c.h.b16 %v469
      %v751 = vunpack.c.l.b16 %v470
      %v752 = vunpack.c.h.b16 %v470
      %v753 = vunpack.c.l.b16 %v471
      %v754 = vunpack.c.h.b16 %v471
      %v755 = vunpack.c.l.b16 %v472
      %v756 = vunpack.c.h.b16 %v472
      %v757 = vunpack.c.l.b16 %v473
      %v758 = vunpack.c.h.b16 %v473
      %v759 = vunpack.c.l.b16 %v474
      %v760 = vunpack.c.h.b16 %v474
      %v761 = vunpack.c.l.b16 %v475
      %v762 = vunpack.c.h.b16 %v475
      %v763 = vunpack.c.l.b16 %v476
      %v764 = vunpack.c.h.b16 %v476
      %v765 = vunpack.c.l.b16 %v477
      %v766 = vunpack.c.h.b16 %v477
      %v767 = vunpack.c.l.b16 %v478
      %v768 = vunpack.c.h.b16 %v478
      %v769 = vunpack.c.l.b16 %v479
      %v770 = vunpack.c.h.b16 %v479
      %v771 = vunpack.c.l.b16 %v480
      %v772 = vunpack.c.h.b16 %v480
      %v773 = vunpack.c.l.b16 %v481
      %v774 = vunpack.c.h.b16 %v481
      %v775 = vunpack.c.l.b16 %v482
      %v776 = vunpack.c.h.b16 %v482
      %v777 = vunpack.c.l.b16 %v483
      %v778 = vunpack.c.h.b16 %v483
      %v779 = vunpack.c.l.b16 %v484
      %v780 = vunpack.c.h.b16 %v484
      %v781 = vunpack.c.l.b16 %v485
      %v782 = vunpack.c.h.b16 %v485
      %v783 = vunpack.c.l.b16 %v486
      %v784 = vunpack.c.h.b16 %v486
      %v785 = vunpack.c.l.b16 %v487
      %v786 = vunpack.c.h.b16 %v487
      %v787 = vunpack.c.l.b16 %v488
      %v788 = vunpack.c.h.b16 %v488
      %v789 = vunpack.c.l.b16 %v489
      %v790 = vunpack.c.h.b16 %v489
      %v791 = vunpack.c.l.b16 %v490
      %v792 = vunpack.c.h.b16 %v490
      %v793 = vunpack.c.l.b16 %v491
      %v794 = vunpack.c.h.b16 %v491
      %v795 = vunpack.c.l.b16 %v492
      %v796 = vunpack.c.h.b16 %v492
      %v797 = vunpack.c.l.b16 %v493
      %v798 = vunpack.c.h.b16 %v493
      %v799 = vunpack.c.l.b16 %v494
      %v800 = vunpack.c.h.b16 %v494
      %v801 = vunpack.c.l.b16 %v495
      %v802 = vunpack.c.h.b16 %v495
      %v803 = vunpack.c.l.b16 %v496
      %v804 = vunpack.c.h.b16 %v496
      %v805 = vunpack.c.l.b16 %v497
      %v806 = vunpack.c.h.b16 %v497
      %v807 = vunpack.c.l.b16 %v498
      %v808 = vunpack.c.h.b16 %v498
      %v809 = vunpack.c.l.b16 %v499
      %v810 = vunpack.c.h.b16 %v499
      %v811 = vunpack.c.l.b16 %v500
      %v812 = vunpack.c.h.b16 %v500
      %v813 = vunpack.c.l.b16 %v501
      %v814 = vunpack.c.h.b16 %v501
      %v815 = vunpack.c.l.b16 %v502
      %v816 = vunpack.c.h.b16 %v502
      %v817 = vunpack.c.l.b16 %v503
      %v818 = vunpack.c.h.b16 %v503
      %v819 = vunpack.c.l.b16 %v504
      %v820 = vunpack.c.h.b16 %v504
      %v821 = vunpack.c.l.b16 %v505
      %v822 = vunpack.c.h.b16 %v505
      %v823 = vunpack.c.l.b16 %v506
      %v824 = vunpack.c.h.b16 %v506
      %v825 = vunpack.c.l.b16 %v507
      %v826 = vunpack.c.h.b16 %v507
      %v827 = vunpack.c.l.b16 %v508
      %v828 = vunpack.c.h.b16 %v508
      %v829 = vunpack.c.l.b16 %v509
      %v830 = vunpack.c.h.b16 %v509
      %v831 = vunpack.c.l.b16 %v510
      %v832 = vunpack.c.h.b16 %v510
      %v833 = vunpack.c.l.b16 %v511
      %v834 = vunpack.c.h.b16 %v511
      %v835 = vunpack.c.l.b16 %v512
      %v836 = vunpack.c.h.b16 %v512
      %v837 = vunpack.c.l.b16 %v513
      %v838 = vunpack.c.h.b16 %v513
      %v839 = vunpack.c.l.b16 %v514
      %v840 = vunpack.c.h.b16 %v514
      %v841 = vunpack.c.l.b16 %v515
      %v842 = vunpack.c.h.b16 %v515
      %v843 = vunpack.c.l.b16 %v516
      %v844 = vunpack.c.h.b16 %v516
      %v845 = vunpack.c.l.b16 %v517
      %v846 = vunpack.c.h.b16 %v517
      %v847 = vunpack.c.l.b16 %v518
      %v848 = vunpack.c.h.b16 %v518
      %v849 = vunpack.c.l.b16 %v519
      %v850 = vunpack.c.h.b16 %v519
      %v851 = vunpack.c.l.b16 %v520
      %v852 = vunpack.c.h.b16 %v520
      %v853 = vunpack.c.l.b16 %v521
      %v854 = vunpack.c.h.b16 %v521
      %v855 = vunpack.c.l.b16 %v522
      %v856 = vunpack.c.h.b16 %v522
      %v857 = vunpack.c.l.b16 %v523
      %v858 = vunpack.c.h.b16 %v523
      %v859 = vunpack.c.l.b16 %v524
      %v860 = vunpack.c.h.b16 %v524
      %v861 = vunpack.c.l.b16 %v525
      %v862 = vunpack.c.h.b16 %v525
      %v863 = vunpack.c.l.b16 %v526
      %v864 = vunpack.c.h.b16 %v526
      %v865 = vunpack.c.l.b16 %v527
      %v866 = vunpack.c.h.b16 %v527
      %v867 = vunpack.c.l.b16 %v528
      %v868 = vunpack.c.h.b16 %v528
      %v869 = vunpack.c.l.b16 %v529
      %v870 = vunpack.c.h.b16 %v529
      %v871 = vunpack.c.l.b16 %v530
      %v872 = vunpack.c.h.b16 %v530
      %v873 = vunpack.c.l.b16 %v531
      %v874 = vunpack.c.h.b16 %v531
      %v875 = vunpack.c.l.b16 %v532
      %v876 = vunpack.c.h.b16 %v532
      %v877 = vunpack.c.l.b16 %v533
      %v878 = vunpack.c.h.b16 %v533
      %v879 = vunpack.c.l.b16 %v534
      %v880 = vunpack.c.h.b16 %v534
      %v881 = vunpack.c.l.b16 %v535
      %v882 = vunpack.c.h.b16 %v535
      %v883 = vunpack.c.l.b16 %v536
      %v884 = vunpack.c.h.b16 %v536
      %v885 = vunpack.c.l.b16 %v537
      %v886 = vunpack.c.h.b16 %v537
      %v887 = vunpack.c.l.b16 %v538
      %v888 = vunpack.c.h.b16 %v538
      %v889 = vunpack.c.l.b16 %v539
      %v890 = vunpack.c.h.b16 %v539
      %v891 = vunpack.c.l.b16 %v540
      %v892 = vunpack.c.h.b16 %v540
      %v893 = vunpack.c.l.b16 %v541
      %v894 = vunpack.c.h.b16 %v541
      %v895 = vunpack.c.l.b16 %v542
      %v896 = vunpack.c.h.b16 %v542
      %v897 = vunpack.c.l.b16 %v543
      %v898 = vunpack.c.h.b16 %v543
      %v899 = vunpack.c.l.b16 %v544
      %v900 = vunpack.c.h.b16 %v544
      %v901 = vpack.c.b16 %v707, %v705
      %v902 = vpack.c.b16 %v708, %v706
      %v903 = vpack.c.b16 %v711, %v709
      %v904 = vpack.c.b16 %v712, %v710
      %v905 = vpack.c.b16 %v715, %v713
      %v906 = vpack.c.b16 %v716, %v714
      %v907 = vpack.c.b16 %v719, %v717
      %v908 = vpack.c.b16 %v720, %v718
      %v909 = vpack.c.b16 %v723, %v721
      %v910 = vpack.c.b16 %v724, %v722
      %v911 = vpack.c.b16 %v727, %v725
      %v912 = vpack.c.b16 %v728, %v726
      %v913 = vpack.c.b16 %v731, %v729
      %v914 = vpack.c.b16 %v732, %v730
      %v915 = vpack.c.b16 %v735, %v733
      %v916 = vpack.c.b16 %v736, %v734
      %v917 = vpack.c.b16 %v739, %v737
      %v918 = vpack.c.b16 %v740, %v738
      %v919 = vpack.c.b16 %v743, %v741
      %v920 = vpack.c.b16 %v744, %v742
      %v921 = vpack.c.b16 %v747, %v745
      %v922 = vpack.c.b16 %v748, %v746
      %v923 = vpack.c.b16 %v751, %v749
      %v924 = vpack.c.b16 %v752, %v750
      %v925 = vpack.c.b16 %v755, %v753
      %v926 = vpack.c.b16 %v756, %v754
      %v927 = vpack.c.b16 %v759, %v757
      %v928 = vpack.c.b16 %v760, %v758
      %v929 = vpack.c.b16 %v763, %v761
      %v930 = vpack.c.b16 %v764, %v762
      %v931 = vpack.c.b16 %v767, %v765
      %v932 = vpack.c.b16 %v768, %v766
      %v933 = vpack.c.b16 %v771, %v769
      %v934 = vpack.c.b16 %v772, %v770
      %v935 = vpack.c.b16 %v775, %v773
      %v936 = vpack.c.b16 %v776, %v774
      %v937 = vpack.c.b16 %v779, %v777
      %v938 = vpack.c.b16 %v780, %v778
      %v939 = vpack.c.b16 %v783, %v781
      %v940 = vpack.c.b16 %v784, %v782
      %v941 = vpack.c.b16 %v787, %v785
      %v942 = vpack.c.b16 %v788, %v786
      %v943 = vpack.c.b16 %v791, %v789
      %v944 = vpack.c.b16 %v792, %v790
      %v945 = vpack.c.b16 %v795, %v793
      %v946 = vpack.c.b16 %v796, %v794
      %v947 = vpack.c.b16 %v799, %v797
      %v948 = vpack.c.b16 %v800, %v798
      %v949 = vpack.c.b16 %v803, %v801
      %v950 = vpack.c.b16 %v804, %v802
      %v951 = vpack.c.b16 %v807, %v805
      %v952 = vpack.c.b16 %v808, %v806
      %v953 = vpack.c.b16 %v811, %v809
      %v954 = vpack.c.b16 %v812, %v810
      %v955 = vpack.c.b16 %v815, %v813
      %v956 = vpack.c.b16 %v816, %v814
      %v957 = vpack.c.b16 %v819, %v817
      %v958 = vpack.c.b16 %v820, %v818
      %v959 = vpack.c.b16 %v823, %v821
      %v960 = vpack.c.b16 %v824, %v822
      %v961 = vpack.c.b16 %v827, %v825
      %v962 = vpack.c.b16 %v828, %v826
      %v963 = vpack.c.b16 %v831, %v829
      %v964 = vpack.c.b16 %v832, %v830
      %v965 = vpack.c.b16 %v835, %v833
      %v966 = vpack.c.b16 %v836, %v834
      %v967 = vpack.c.b16 %v839, %v837
      %v968 = vpack.c.b16 %v840, %v838
      %v969 = vpack.c.b16 %v843, %v841
      %v970 = vpack.c.b16 %v844, %v842
      %v971 = vpack.c.b16 %v847, %v845
      %v972 = vpack.c.b16 %v848, %v846
      %v973 = vpack.c.b16 %v851, %v849
      %v974 = vpack.c.b16 %v852, %v850
      %v975 = vpack.c.b16 %v855, %v853
      %v976 = vpack.c.b16 %v856, %v854
      %v977 = vpack.c.b16 %v859, %v857
      %v978 = vpack.c.b16 %v860, %v858
      %v979 = vpack.c.b16 %v863, %v861
      %v980 = vpack.c.b16 %v864, %v862
      %v981 = vpack.c.b16 %v867, %v865
      %v982 = vpack.c.b16 %v868, %v866
      %v983 = vpack.c.b16 %v871, %v869
      %v984 = vpack.c.b16 %v872, %v870
      %v985 = vpack.c.b16 %v875, %v873
      %v986 = vpack.c.b16 %v876, %v874
      %v987 = vpack.c.b16 %v879, %v877
      %v988 = vpack.c.b16 %v880, %v878
      %v989 = vpack.c.b16 %v883, %v881
      %v990 = vpack.c.b16 %v884, %v882
      %v991 = vpack.c.b16 %v887, %v885
      %v992 = vpack.c.b16 %v888, %v886
      %v993 = vpack.c.b16 %v891, %v889
      %v994 = vpack.c.b16 %v892, %v890
      %v995 = vpack.c.b16 %v895, %v893
      %v996 = vpack.c.b16 %v896, %v894
      %v997 = vpack.c.b16 %v899, %v897
      %v998 = vpack.c.b16 %v900, %v898
      %vm1097 = vcmask 130048
      %v1099 = vsel %vm1097, %v445, 0
      %1101 = vmatprep.subr.bf16.mxu0 %v902
      %1102 = vmatpush1.bf16.msra.mxu0 %v901
      %1103 = vmatprep.subr.bf16.mxu0 %v904
      %1104 = vmatpush1.bf16.msra.mxu0 %v903
      %1105 = vmatprep.subr.bf16.mxu0 %v906
      %1106 = vmatpush1.bf16.msra.mxu0 %v905
      %1107 = vmatprep.subr.bf16.mxu0 %v908
      %1108 = vmatpush1.bf16.msra.mxu0 %v907
      %1109 = vmatprep.subr.bf16.mxu0 %v910
      %1110 = vmatpush1.bf16.msra.mxu0 %v909
      %1111 = vmatprep.subr.bf16.mxu0 %v912
      %1112 = vmatpush1.bf16.msra.mxu0 %v911
      %1113 = vmatprep.subr.bf16.mxu0 %v914
      %1114 = vmatpush1.bf16.msra.mxu0 %v913
      %1115 = vmatprep.subr.bf16.mxu0 %v916
      %1116 = vmatpush1.bf16.msra.mxu0 %v915
      %1117 = vmatprep.subr.bf16.mxu0 %v918
      %1118 = vmatpush1.bf16.msra.mxu0 %v917
      %1119 = vmatprep.subr.bf16.mxu0 %v920
      %1120 = vmatpush1.bf16.msra.mxu0 %v919
      %1121 = vmatprep.subr.bf16.mxu0 %v922
      %1122 = vmatpush1.bf16.msra.mxu0 %v921
      %1123 = vmatprep.subr.bf16.mxu0 %v924
      %1124 = vmatpush1.bf16.msra.mxu0 %v923
      %1125 = vmatprep.subr.bf16.mxu0 %v926
      %1126 = vmatpush1.bf16.msra.mxu0 %v925
      %1127 = vmatprep.subr.bf16.mxu0 %v928
      %1128 = vmatpush1.bf16.msra.mxu0 %v927
      %1129 = vmatprep.subr.bf16.mxu0 %v930
      %1130 = vmatpush1.bf16.msra.mxu0 %v929
      %1131 = vmatprep.subr.bf16.mxu0 %v932
      %1132 = vmatpush1.bf16.msra.mxu0 %v931
      %1133 = vmatprep.mubr.bf16.mxu0 %v440
      %1134 = vmatmul.mubr.bf16.gmra.mrb[0].mxu0 %v439
      %v1135 = vpop.f32.mrb[0].mxu0
      %v1136 = vadd.f32 %v601, %v1135
      %v1137 = vpop.f32.mrb[0].mxu0
      %v1138 = vadd.f32 %v603, %v1137
      %v1139 = vpop.f32.mrb[0].mxu0
      %v1140 = vpop.f32.mrb[0].mxu0
      %1141 = vdwg.mxu0
      %1142 = vmatprep.subr.bf16.mxu0 %v934
      %1143 = vmatpush1.bf16.msra.mxu0 %v933
      %1144 = vmatprep.subr.bf16.mxu0 %v936
      %1145 = vmatpush1.bf16.msra.mxu0 %v935
      %1146 = vmatprep.subr.bf16.mxu0 %v938
      %1147 = vmatpush1.bf16.msra.mxu0 %v937
      %1148 = vmatprep.subr.bf16.mxu0 %v940
      %1149 = vmatpush1.bf16.msra.mxu0 %v939
      %1150 = vmatprep.subr.bf16.mxu0 %v942
      %1151 = vmatpush1.bf16.msra.mxu0 %v941
      %1152 = vmatprep.subr.bf16.mxu0 %v944
      %1153 = vmatpush1.bf16.msra.mxu0 %v943
      %1154 = vmatprep.subr.bf16.mxu0 %v946
      %1155 = vmatpush1.bf16.msra.mxu0 %v945
      %1156 = vmatprep.subr.bf16.mxu0 %v948
      %1157 = vmatpush1.bf16.msra.mxu0 %v947
      %1158 = vmatprep.subr.bf16.mxu0 %v950
      %1159 = vmatpush1.bf16.msra.mxu0 %v949
      %1160 = vmatprep.subr.bf16.mxu0 %v952
      %1161 = vmatpush1.bf16.msra.mxu0 %v951
      %1162 = vmatprep.subr.bf16.mxu0 %v954
      %1163 = vmatpush1.bf16.msra.mxu0 %v953
      %1164 = vmatprep.subr.bf16.mxu0 %v956
      %1165 = vmatpush1.bf16.msra.mxu0 %v955
      %1166 = vmatprep.subr.bf16.mxu0 %v958
      %1167 = vmatpush1.bf16.msra.mxu0 %v957
      %1168 = vmatprep.subr.bf16.mxu0 %v960
      %1169 = vmatpush1.bf16.msra.mxu0 %v959
      %1170 = vmatprep.subr.bf16.mxu0 %v962
      %1171 = vmatpush1.bf16.msra.mxu0 %v961
      %1172 = vmatprep.subr.bf16.mxu0 %v964
      %1173 = vmatpush1.bf16.msra.mxu0 %v963
      %1174 = vmatprep.mubr.bf16.mxu0 %v442
      %1175 = vmatmul.mubr.bf16.gmra.mrb[0].mxu0 %v441
      %v1176 = vpop.f32.mrb[0].mxu0
      %v1177 = vadd.f32 %v1136, %v1176
      %v1178 = vpop.f32.mrb[0].mxu0
      %v1179 = vadd.f32 %v1138, %v1178
      %v1180 = vpop.f32.mrb[0].mxu0
      %v1181 = vpop.f32.mrb[0].mxu0
      %1182 = vdwg.mxu0
      %1183 = vmatprep.subr.bf16.mxu0 %v966
      %1184 = vmatpush1.bf16.msra.mxu0 %v965
      %1185 = vmatprep.subr.bf16.mxu0 %v968
      %1186 = vmatpush1.bf16.msra.mxu0 %v967
      %1187 = vmatprep.subr.bf16.mxu0 %v970
      %1188 = vmatpush1.bf16.msra.mxu0 %v969
      %1189 = vmatprep.subr.bf16.mxu0 %v972
      %1190 = vmatpush1.bf16.msra.mxu0 %v971
      %1191 = vmatprep.subr.bf16.mxu0 %v974
      %1192 = vmatpush1.bf16.msra.mxu0 %v973
      %1193 = vmatprep.subr.bf16.mxu0 %v976
      %1194 = vmatpush1.bf16.msra.mxu0 %v975
      %1195 = vmatprep.subr.bf16.mxu0 %v978
      %1196 = vmatpush1.bf16.msra.mxu0 %v977
      %1197 = vmatprep.subr.bf16.mxu0 %v980
      %1198 = vmatpush1.bf16.msra.mxu0 %v979
      %1199 = vmatprep.subr.bf16.mxu0 %v982
      %1200 = vmatpush1.bf16.msra.mxu0 %v981
      %1201 = vmatprep.subr.bf16.mxu0 %v984
      %1202 = vmatpush1.bf16.msra.mxu0 %v983
      %1203 = vmatprep.subr.bf16.mxu0 %v986
      %1204 = vmatpush1.bf16.msra.mxu0 %v985
      %1205 = vmatprep.subr.bf16.mxu0 %v988
      %1206 = vmatpush1.bf16.msra.mxu0 %v987
      %1207 = vmatprep.subr.bf16.mxu0 %v990
      %1208 = vmatpush1.bf16.msra.mxu0 %v989
      %1209 = vmatprep.subr.bf16.mxu0 %v992
      %1210 = vmatpush1.bf16.msra.mxu0 %v991
      %1211 = vmatprep.subr.bf16.mxu0 %v994
      %1212 = vmatpush1.bf16.msra.mxu0 %v993
      %1213 = vmatprep.subr.bf16.mxu0 %v996
      %1214 = vmatpush1.bf16.msra.mxu0 %v995
      %1215 = vmatprep.mubr.bf16.mxu0 %v444
      %1216 = vmatmul.mubr.bf16.gmra.mrb[0].mxu0 %v443
      %v1217 = vpop.f32.mrb[0].mxu0
      %v1218 = vadd.f32 %v1177, %v1217
      %v1219 = vpop.f32.mrb[0].mxu0
      %v1220 = vadd.f32 %v1179, %v1219
      %v1221 = vpop.f32.mrb[0].mxu0
      %v1222 = vpop.f32.mrb[0].mxu0
      %1223 = vdwg.mxu0
      %1224 = vmatprep.subr.bf16.mxu0 %v998
      %1225 = vmatpush1.bf16.msra.mxu0 %v997
      %1226 = vmatprep.subr.bf16.mxu0 0
      %1227 = vmatpush1.bf16.msra.mxu0 0
      %1228 = vmatprep.subr.bf16.mxu0 0
      %1229 = vmatpush1.bf16.msra.mxu0 0
      %1230 = vmatprep.subr.bf16.mxu0 0
      %1231 = vmatpush1.bf16.msra.mxu0 0
      %1232 = vmatprep.subr.bf16.mxu0 0
      %1233 = vmatpush1.bf16.msra.mxu0 0
      %1234 = vmatprep.subr.bf16.mxu0 0
      %1235 = vmatpush1.bf16.msra.mxu0 0
      %1236 = vmatprep.subr.bf16.mxu0 0
      %1237 = vmatpush1.bf16.msra.mxu0 0
      %1238 = vmatprep.subr.bf16.mxu0 0
      %1239 = vmatpush1.bf16.msra.mxu0 0
      %1240 = vmatprep.subr.bf16.mxu0 0
      %1241 = vmatpush1.bf16.msra.mxu0 0
      %1242 = vmatprep.subr.bf16.mxu0 0
      %1243 = vmatpush1.bf16.msra.mxu0 0
      %1244 = vmatprep.subr.bf16.mxu0 0
      %1245 = vmatpush1.bf16.msra.mxu0 0
      %1246 = vmatprep.subr.bf16.mxu0 0
      %1247 = vmatpush1.bf16.msra.mxu0 0
      %1248 = vmatprep.subr.bf16.mxu0 0
      %1249 = vmatpush1.bf16.msra.mxu0 0
      %1250 = vmatprep.subr.bf16.mxu0 0
      %1251 = vmatpush1.bf16.msra.mxu0 0
      %1252 = vmatprep.subr.bf16.mxu0 0
      %1253 = vmatpush1.bf16.msra.mxu0 0
      %1254 = vmatprep.subr.bf16.mxu0 0
      %1255 = vmatpush1.bf16.msra.mxu0 0
      %1256 = vmatprep.mubr.bf16.mxu0 0
      %1257 = vmatmul.mubr.bf16.gmra.mrb[0].mxu0 %v1099
      %v1258 = vpop.f32.mrb[0].mxu0
      %v1259 = vadd.f32 %v1218, %v1258
      %v1260 = vpop.f32.mrb[0].mxu0
      %v1261 = vadd.f32 %v1220, %v1260
      %v1262 = vpop.f32.mrb[0].mxu0
      %v1263 = vpop.f32.mrb[0].mxu0
      %1264 = vdwg.mxu0
      %v1265 = vld [vmem:[%s4] sm:$0x3]
      %v1267 = vlaneseq
      %v1268 = vshrl.u32 %v1267, 7
      %v1269 = vsub.s32 0, %v1268
      %v1270 = vrot.slane %v1265, %v1269
      %v1271 = vlaneseq
      %v1272 = vshrl.u32 %v1271, 7
      %v1273 = vsub.s32 1, %v1272
      %v1274 = vrot.slane %v1265, %v1273
      %v1277 = vadd.f32 %v1259, %v1270
      %v1278 = vadd.f32 %v1261, %v1274
      %v1279 = vmax.f32 %v1277, 0.0
      %v1280 = vmax.f32 %v1278, 0.0
      %v1281 = vpack.c.bf16 %v1279, %v1279
      %v1282 = vpack.c.bf16 %v1280, %v1280
      %v1283 = vld [vmem:[%s5] sm:$0xf]
      %v1284 = vld [vmem:[%s5 + $0x4] sm:$0xf]
      %v1285 = vld [vmem:[%s5 + $0x8] sm:$0xf]
      %v1286 = vld [vmem:[%s5 + $0xc] sm:$0xf]
      %v1287 = vld [vmem:[%s5 + $0x10] sm:$0xf]
      %v1288 = vld [vmem:[%s5 + $0x14] sm:$0xf]
      %v1289 = vld [vmem:[%s5 + $0x18] sm:$0xf]
      %v1290 = vld [vmem:[%s5 + $0x1c] sm:$0xf]
      %v1291 = vld [vmem:[%s5 + $0x20] sm:$0xf]
      %v1292 = vld [vmem:[%s5 + $0x24] sm:$0xf]
      %v1293 = vld [vmem:[%s5 + $0x28] sm:$0xf]
      %v1294 = vld [vmem:[%s5 + $0x2c] sm:$0xf]
      %v1295 = vld [vmem:[%s5 + $0x30] sm:$0xf]
      %v1296 = vld [vmem:[%s5 + $0x34] sm:$0xf]
      %v1297 = vld [vmem:[%s5 + $0x38] sm:$0xf]
      %v1298 = vld [vmem:[%s5 + $0x3c] sm:$0xf]
      %v1299 = vld [vmem:[%s5 + $0x40] sm:$0xf]
      %v1300 = vld [vmem:[%s5 + $0x44] sm:$0xf]
      %v1301 = vld [vmem:[%s5 + $0x48] sm:$0xf]
      %v1302 = vld [vmem:[%s5 + $0x4c] sm:$0xf]
      %v1303 = vld [vmem:[%s5 + $0x50] sm:$0xf]
      %v1304 = vld [vmem:[%s5 + $0x54] sm:$0xf]
      %v1305 = vld [vmem:[%s5 + $0x58] sm:$0xf]
      %v1306 = vld [vmem:[%s5 + $0x5c] sm:$0xf]
      %v1307 = vld [vmem:[%s5 + $0x60] sm:$0xf]
      %v1308 = vld [vmem:[%s5 + $0x64] sm:$0xf]
      %v1309 = vld [vmem:[%s5 + $0x68] sm:$0xf]
      %v1310 = vld [vmem:[%s5 + $0x6c] sm:$0xf]
      %v1311 = vld [vmem:[%s5 + $0x70] sm:$0xf]
      %v1312 = vld [vmem:[%s5 + $0x74] sm:$0xf]
      %v1313 = vld [vmem:[%s5 + $0x78] sm:$0xf]
      %v1314 = vld [vmem:[%s5 + $0x7c] sm:$0xf]
      %v1315 = vld [vmem:[%s6] sm:$0x1]
      %v1317 = vlaneseq
      %v1318 = vshrl.u32 %v1317, 7
      %v1319 = vsub.s32 0, %v1318
      %v1320 = vrot.slane %v1315, %v1319
      %v1354 = vunpack.c.l.b16 %v1283
      %v1355 = vunpack.c.l.b16 %v1284
      %v1356 = vunpack.c.l.b16 %v1285
      %v1357 = vunpack.c.l.b16 %v1286
      %v1358 = vunpack.c.l.b16 %v1287
      %v1359 = vunpack.c.l.b16 %v1288
      %v1360 = vunpack.c.l.b16 %v1289
      %v1361 = vunpack.c.l.b16 %v1290
      %v1362 = vunpack.c.l.b16 %v1291
      %v1363 = vunpack.c.l.b16 %v1292
      %v1364 = vunpack.c.l.b16 %v1293
      %v1365 = vunpack.c.l.b16 %v1294
      %v1366 = vunpack.c.l.b16 %v1295
      %v1367 = vunpack.c.l.b16 %v1296
      %v1368 = vunpack.c.l.b16 %v1297
      %v1369 = vunpack.c.l.b16 %v1298
      %v1370 = vunpack.c.l.b16 %v1299
      %v1371 = vunpack.c.l.b16 %v1300
      %v1372 = vunpack.c.l.b16 %v1301
      %v1373 = vunpack.c.l.b16 %v1302
      %v1374 = vunpack.c.l.b16 %v1303
      %v1375 = vunpack.c.l.b16 %v1304
      %v1376 = vunpack.c.l.b16 %v1305
      %v1377 = vunpack.c.l.b16 %v1306
      %v1378 = vunpack.c.l.b16 %v1307
      %v1379 = vunpack.c.l.b16 %v1308
      %v1380 = vunpack.c.l.b16 %v1309
      %v1381 = vunpack.c.l.b16 %v1310
      %v1382 = vunpack.c.l.b16 %v1311
      %v1383 = vunpack.c.l.b16 %v1312
      %v1384 = vunpack.c.l.b16 %v1313
      %v1385 = vunpack.c.l.b16 %v1314
      %v1386 = vpack.c.b16 %v1355, %v1354
      %v1387 = vpack.c.b16 %v1357, %v1356
      %v1388 = vpack.c.b16 %v1359, %v1358
      %v1389 = vpack.c.b16 %v1361, %v1360
      %v1390 = vpack.c.b16 %v1363, %v1362
      %v1391 = vpack.c.b16 %v1365, %v1364
      %v1392 = vpack.c.b16 %v1367, %v1366
      %v1393 = vpack.c.b16 %v1369, %v1368
      %v1394 = vpack.c.b16 %v1371, %v1370
      %v1395 = vpack.c.b16 %v1373, %v1372
      %v1396 = vpack.c.b16 %v1375, %v1374
      %v1397 = vpack.c.b16 %v1377, %v1376
      %v1398 = vpack.c.b16 %v1379, %v1378
      %v1399 = vpack.c.b16 %v1381, %v1380
      %v1400 = vpack.c.b16 %v1383, %v1382
      %v1401 = vpack.c.b16 %v1385, %v1384
      %1418 = vmatprep.subr.bf16.mxu0 0
      %1419 = vmatpush1.bf16.msra.mxu0 %v1386
      %1420 = vmatprep.subr.bf16.mxu0 0
      %1421 = vmatpush1.bf16.msra.mxu0 %v1387
      %1422 = vmatprep.subr.bf16.mxu0 0
      %1423 = vmatpush1.bf16.msra.mxu0 %v1388
      %1424 = vmatprep.subr.bf16.mxu0 0
      %1425 = vmatpush1.bf16.msra.mxu0 %v1389
      %1426 = vmatprep.subr.bf16.mxu0 0
      %1427 = vmatpush1.bf16.msra.mxu0 %v1390
      %1428 = vmatprep.subr.bf16.mxu0 0
      %1429 = vmatpush1.bf16.msra.mxu0 %v1391
      %1430 = vmatprep.subr.bf16.mxu0 0
      %1431 = vmatpush1.bf16.msra.mxu0 %v1392
      %1432 = vmatprep.subr.bf16.mxu0 0
      %1433 = vmatpush1.bf16.msra.mxu0 %v1393
      %1434 = vmatprep.subr.bf16.mxu0 0
      %1435 = vmatpush1.bf16.msra.mxu0 %v1394
      %1436 = vmatprep.subr.bf16.mxu0 0
      %1437 = vmatpush1.bf16.msra.mxu0 %v1395
      %1438 = vmatprep.subr.bf16.mxu0 0
      %1439 = vmatpush1.bf16.msra.mxu0 %v1396
      %1440 = vmatprep.subr.bf16.mxu0 0
      %1441 = vmatpush1.bf16.msra.mxu0 %v1397
      %1442 = vmatprep.subr.bf16.mxu0 0
      %1443 = vmatpush1.bf16.msra.mxu0 %v1398
      %1444 = vmatprep.subr.bf16.mxu0 0
      %1445 = vmatpush1.bf16.msra.mxu0 %v1399
      %1446 = vmatprep.subr.bf16.mxu0 0
      %1447 = vmatpush1.bf16.msra.mxu0 %v1400
      %1448 = vmatprep.subr.bf16.mxu0 0
      %1449 = vmatpush1.bf16.msra.mxu0 %v1401
      %1450 = vmatprep.mubr.bf16.mxu0 %v1282
      %1451 = vmatmul.mubr.bf16.gmra.mrb[0].mxu0 %v1281
      %v1452 = vpop.f32.mrb[0].mxu0
      %v1453 = vadd.f32 %v1320, %v1452
      %v1454 = vpop.f32.mrb[0].mxu0
      %v1455 = vpop.f32.mrb[0].mxu0
      %v1456 = vpop.f32.mrb[0].mxu0
      %1457 = vdwg.mxu0
      %v1458 = vmax.f32 %v1453, 0.0
      %v1459 = vpack.c.bf16 %v1458, %v1458
      %v1460 = vld [vmem:[%s7] sm:$0xff]
      %v1461 = vld [vmem:[%s7 + $0x8] sm:$0xff]
      %v1462 = vld [vmem:[%s7 + $0x10] sm:$0xff]
      %v1463 = vld [vmem:[%s7 + $0x18] sm:$0xff]
      %v1464 = vld [vmem:[%s7 + $0x20] sm:$0xff]
      %v1465 = vld [vmem:[%s7 + $0x28] sm:$0xff]
      %v1466 = vld [vmem:[%s7 + $0x30] sm:$0xff]
      %v1467 = vld [vmem:[%s7 + $0x38] sm:$0xff]
      %v1468 = vld [vmem:[%s8] sm:$0xff]
      %v1469 = vld [vmem:[%s8 + $0x8] sm:$0x11]
      %v1472 = vunpack.c.l.b16 %v1468
      %v1473 = vunpack.c.h.b16 %v1468
      %v1474 = vunpack.c.l.b16 %v1469
      %v1475 = vunpack.c.h.b16 %v1469
      %v1476 = vpack.c.b16 %v1474, %v1472
      %v1477 = vpack.c.b16 %v1475, %v1473
      %v1479 = vsel %vm559, %v1476, 0
      %v1482 = vsel %vm559, %v1477, 0
      %1484 = vmatprep.subr.bf16.mxu0 %v1482
      %1485 = vmatpush1.bf16.msra.mxu0 %v1479
      %1486 = vmatprep.subr.bf16.mxu0 0
      %1487 = vmatpush1.bf16.msra.mxu0 0
      %1488 = vmatprep.subr.bf16.mxu0 0
      %1489 = vmatpush1.bf16.msra.mxu0 0
      %1490 = vmatprep.subr.bf16.mxu0 0
      %1491 = vmatpush1.bf16.msra.mxu0 0
      %1492 = vmatprep.subr.bf16.mxu0 0
      %1493 = vmatpush1.bf16.msra.mxu0 0
      %1494 = vmatprep.subr.bf16.mxu0 0
      %1495 = vmatpush1.bf16.msra.mxu0 0
      %1496 = vmatprep.subr.bf16.mxu0 0
      %1497 = vmatpush1.bf16.msra.mxu0 0
      %1498 = vmatprep.subr.bf16.mxu0 0
      %1499 = vmatpush1.bf16.msra.mxu0 0
      %1500 = vmatprep.subr.bf16.mxu0 0
      %1501 = vmatpush1.bf16.msra.mxu0 0
      %1502 = vmatprep.subr.bf16.mxu0 0
      %1503 = vmatpush1.bf16.msra.mxu0 0
      %1504 = vmatprep.subr.bf16.mxu0 0
      %1505 = vmatpush1.bf16.msra.mxu0 0
      %1506 = vmatprep.subr.bf16.mxu0 0
      %1507 = vmatpush1.bf16.msra.mxu0 0
      %1508 = vmatprep.subr.bf16.mxu0 0
      %1509 = vmatpush1.bf16.msra.mxu0 0
      %1510 = vmatprep.subr.bf16.mxu0 0
      %1511 = vmatpush1.bf16.msra.mxu0 0
      %1512 = vmatprep.subr.bf16.mxu0 0
      %1513 = vmatpush1.bf16.msra.mxu0 0
      %1514 = vmatprep.subr.bf16.mxu0 0
      %1515 = vmatpush1.bf16.msra.mxu0 0
      %1516 = vmatprep.mubr.bf16.mxu0 0
      %1517 = vmatmul.mubr.bf16.gmra.mrb[0].mxu0 %v557
      %v1518 = vpop.f32.mrb[0].mxu0
      %v1519 = vadd.f32 0.0, %v1518
      %v1520 = vpop.f32.mrb[0].mxu0
      %v1521 = vadd.f32 0.0, %v1520
      %v1522 = vpop.f32.mrb[0].mxu0
      %v1523 = vpop.f32.mrb[0].mxu0
      %1524 = vdwg.mxu0
      %v1533 = vunpack.c.l.b16 %v1460
      %v1534 = vunpack.c.h.b16 %v1460
      %v1535 = vunpack.c.l.b16 %v1461
      %v1536 = vunpack.c.h.b16 %v1461
      %v1537 = vunpack.c.l.b16 %v1462
      %v1538 = vunpack.c.h.b16 %v1462
      %v1539 = vunpack.c.l.b16 %v1463
      %v1540 = vunpack.c.h.b16 %v1463
      %v1541 = vunpack.c.l.b16 %v1464
      %v1542 = vunpack.c.h.b16 %v1464
      %v1543 = vunpack.c.l.b16 %v1465
      %v1544 = vunpack.c.h.b16 %v1465
      %v1545 = vunpack.c.l.b16 %v1466
      %v1546 = vunpack.c.h.b16 %v1466
      %v1547 = vunpack.c.l.b16 %v1467
      %v1548 = vunpack.c.h.b16 %v1467
      %v1549 = vpack.c.b16 %v1535, %v1533
      %v1550 = vpack.c.b16 %v1536, %v1534
      %v1551 = vpack.c.b16 %v1539, %v1537
      %v1552 = vpack.c.b16 %v1540, %v1538
      %v1553 = vpack.c.b16 %v1543, %v1541
      %v1554 = vpack.c.b16 %v1544, %v1542
      %v1555 = vpack.c.b16 %v1547, %v1545
      %v1556 = vpack.c.b16 %v1548, %v1546
      %vm1565 = vcmask 523264
      %v1567 = vsel %vm1565, %v1459, 0
      %1569 = vmatprep.subr.bf16.mxu0 %v1550
      %1570 = vmatpush1.bf16.msra.mxu0 %v1549
      %1571 = vmatprep.subr.bf16.mxu0 %v1552
      %1572 = vmatpush1.bf16.msra.mxu0 %v1551
      %1573 = vmatprep.subr.bf16.mxu0 %v1554
      %1574 = vmatpush1.bf16.msra.mxu0 %v1553
      %1575 = vmatprep.subr.bf16.mxu0 %v1556
      %1576 = vmatpush1.bf16.msra.mxu0 %v1555
      %1577 = vmatprep.subr.bf16.mxu0 0
      %1578 = vmatpush1.bf16.msra.mxu0 0
      %1579 = vmatprep.subr.bf16.mxu0 0
      %1580 = vmatpush1.bf16.msra.mxu0 0
      %1581 = vmatprep.subr.bf16.mxu0 0
      %1582 = vmatpush1.bf16.msra.mxu0 0
      %1583 = vmatprep.subr.bf16.mxu0 0
      %1584 = vmatpush1.bf16.msra.mxu0 0
      %1585 = vmatprep.subr.bf16.mxu0 0
      %1586 = vmatpush1.bf16.msra.mxu0 0
      %1587 = vmatprep.subr.bf16.mxu0 0
      %1588 = vmatpush1.bf16.msra.mxu0 0
      %1589 = vmatprep.subr.bf16.mxu0 0
      %1590 = vmatpush1.bf16.msra.mxu0 0
      %1591 = vmatprep.subr.bf16.mxu0 0
      %1592 = vmatpush1.bf16.msra.mxu0 0
      %1593 = vmatprep.subr.bf16.mxu0 0
      %1594 = vmatpush1.bf16.msra.mxu0 0
      %1595 = vmatprep.subr.bf16.mxu0 0
      %1596 = vmatpush1.bf16.msra.mxu0 0
      %1597 = vmatprep.subr.bf16.mxu0 0
      %1598 = vmatpush1.bf16.msra.mxu0 0
      %1599 = vmatprep.subr.bf16.mxu0 0
      %1600 = vmatpush1.bf16.msra.mxu0 0
      %1601 = vmatprep.mubr.bf16.mxu0 0
      %1602 = vmatmul.mubr.bf16.gmra.mrb[0].mxu0 %v1567
      %v1603 = vpop.f32.mrb[0].mxu0
      %v1604 = vadd.f32 %v1519, %v1603
      %v1605 = vpop.f32.mrb[0].mxu0
      %v1606 = vadd.f32 %v1521, %v1605
      %v1607 = vpop.f32.mrb[0].mxu0
      %v1608 = vpop.f32.mrb[0].mxu0
      %1609 = vdwg.mxu0
      %v1610 = vld [vmem:[%s9] sm:$0x3]
      %v1612 = vlaneseq
      %v1613 = vshrl.u32 %v1612, 7
      %v1614 = vsub.s32 0, %v1613
      %v1615 = vrot.slane %v1610, %v1614
      %v1616 = vlaneseq
      %v1617 = vshrl.u32 %v1616, 7
      %v1618 = vsub.s32 1, %v1617
      %v1619 = vrot.slane %v1610, %v1618
      %v1622 = vadd.f32 %v1604, %v1615
      %v1623 = vadd.f32 %v1606, %v1619
      %v1624 = vmax.f32 %v1622, 0.0
      %v1625 = vmax.f32 %v1623, 0.0
      %v1626 = vpack.c.bf16 %v1624, %v1624
      %v1627 = vpack.c.bf16 %v1625, %v1625
      %v1628 = vld [vmem:[%s10] sm:$0xff]
      %v1629 = vld [vmem:[%s10 + $0x8] sm:$0xff]
      %v1630 = vld [vmem:[%s10 + $0x10] sm:$0xff]
      %v1631 = vld [vmem:[%s10 + $0x18] sm:$0xf]
      %v1632 = vld [vmem:[%s10 + $0x1c] sm:$0xff]
      %v1633 = vld [vmem:[%s10 + $0x24] sm:$0xff]
      %v1634 = vld [vmem:[%s10 + $0x2c] sm:$0xff]
      %v1635 = vld [vmem:[%s10 + $0x34] sm:$0xf]
      %v1636 = vld [vmem:[%s10 + $0x38] sm:$0xff]
      %v1637 = vld [vmem:[%s10 + $0x40] sm:$0xff]
      %v1638 = vld [vmem:[%s10 + $0x48] sm:$0xff]
      %v1639 = vld [vmem:[%s10 + $0x50] sm:$0xf]
      %v1640 = vld [vmem:[%s10 + $0x54] sm:$0xff]
      %v1641 = vld [vmem:[%s10 + $0x5c] sm:$0xff]
      %v1642 = vld [vmem:[%s10 + $0x64] sm:$0xff]
      %v1643 = vld [vmem:[%s10 + $0x6c] sm:$0xf]
      %v1644 = vld [vmem:[%s10 + $0x70] sm:$0xff]
      %v1645 = vld [vmem:[%s10 + $0x78] sm:$0xff]
      %v1646 = vld [vmem:[%s10 + $0x80] sm:$0xff]
      %v1647 = vld [vmem:[%s10 + $0x88] sm:$0xf]
      %v1648 = vld [vmem:[%s10 + $0x8c] sm:$0xff]
      %v1649 = vld [vmem:[%s10 + $0x94] sm:$0xff]
      %v1650 = vld [vmem:[%s10 + $0x9c] sm:$0xff]
      %v1651 = vld [vmem:[%s10 + $0xa4] sm:$0xf]
      %v1652 = vld [vmem:[%s10 + $0xa8] sm:$0xff]
      %v1653 = vld [vmem:[%s10 + $0xb0] sm:$0xff]
      %v1654 = vld [vmem:[%s10 + $0xb8] sm:$0xff]
      %v1655 = vld [vmem:[%s10 + $0xc0] sm:$0xf]
      %v1656 = vld [vmem:[%s10 + $0xc4] sm:$0xff]
      %v1657 = vld [vmem:[%s10 + $0xcc] sm:$0xff]
      %v1658 = vld [vmem:[%s10 + $0xd4] sm:$0xff]
      %v1659 = vld [vmem:[%s10 + $0xdc] sm:$0xf]
      %v1660 = vld [vmem:[%s10 + $0xe0] sm:$0xff]
      %v1661 = vld [vmem:[%s10 + $0xe8] sm:$0xff]
      %v1662 = vld [vmem:[%s10 + $0xf0] sm:$0xff]
      %v1663 = vld [vmem:[%s10 + $0xf8] sm:$0xf]
      %v1664 = vld [vmem:[%s10 + $0xfc] sm:$0xff]
      %v1665 = vld [vmem:[%s10 + $0x104] sm:$0xff]
      %v1666 = vld [vmem:[%s10 + $0x10c] sm:$0xff]
      %v1667 = vld [vmem:[%s10 + $0x114] sm:$0xf]
      %v1668 = vld [vmem:[%s10 + $0x118] sm:$0xff]
      %v1669 = vld [vmem:[%s10 + $0x120] sm:$0xff]
      %v1670 = vld [vmem:[%s10 + $0x128] sm:$0xff]
      %v1671 = vld [vmem:[%s10 + $0x130] sm:$0xf]
      %v1672 = vld [vmem:[%s10 + $0x134] sm:$0xff]
      %v1673 = vld [vmem:[%s10 + $0x13c] sm:$0xff]
      %v1674 = vld [vmem:[%s10 + $0x144] sm:$0xff]
      %v1675 = vld [vmem:[%s10 + $0x14c] sm:$0xf]
      %v1676 = vld [vmem:[%s10 + $0x150] sm:$0xff]
      %v1677 = vld [vmem:[%s10 + $0x158] sm:$0xff]
      %v1678 = vld [vmem:[%s10 + $0x160] sm:$0xff]
      %v1679 = vld [vmem:[%s10 + $0x168] sm:$0xf]
      %v1680 = vld [vmem:[%s10 + $0x16c] sm:$0xff]
      %v1681 = vld [vmem:[%s10 + $0x174] sm:$0xff]
      %v1682 = vld [vmem:[%s10 + $0x17c] sm:$0xff]
      %v1683 = vld [vmem:[%s10 + $0x184] sm:$0xf]
      %v1684 = vld [vmem:[%s10 + $0x188] sm:$0xff]
      %v1685 = vld [vmem:[%s10 + $0x190] sm:$0xff]
      %v1686 = vld [vmem:[%s10 + $0x198] sm:$0xff]
      %v1687 = vld [vmem:[%s10 + $0x1a0] sm:$0xf]
      %v1688 = vld [vmem:[%s10 + $0x1a4] sm:$0xff]
      %v1689 = vld [vmem:[%s10 + $0x1ac] sm:$0xff]
      %v1690 = vld [vmem:[%s10 + $0x1b4] sm:$0xff]
      %v1691 = vld [vmem:[%s10 + $0x1bc] sm:$0xf]
      %v1692 = vld [vmem:[%s10 + $0x1c0] sm:$0xff]
      %v1693 = vld [vmem:[%s10 + $0x1c8] sm:$0xff]
      %v1694 = vld [vmem:[%s10 + $0x1d0] sm:$0xff]
      %v1695 = vld [vmem:[%s10 + $0x1d8] sm:$0xf]
      %v1696 = vld [vmem:[%s10 + $0x1dc] sm:$0xff]
      %v1697 = vld [vmem:[%s10 + $0x1e4] sm:$0xff]
      %v1698 = vld [vmem:[%s10 + $0x1ec] sm:$0xff]
      %v1699 = vld [vmem:[%s10 + $0x1f4] sm:$0xf]
      %v1700 = vld [vmem:[%s10 + $0x1f8] sm:$0xff]
      %v1701 = vld [vmem:[%s10 + $0x200] sm:$0xff]
      %v1702 = vld [vmem:[%s10 + $0x208] sm:$0xff]
      %v1703 = vld [vmem:[%s10 + $0x210] sm:$0xf]
      %v1704 = vld [vmem:[%s10 + $0x214] sm:$0xff]
      %v1705 = vld [vmem:[%s10 + $0x21c] sm:$0xff]
      %v1706 = vld [vmem:[%s10 + $0x224] sm:$0xff]
      %v1707 = vld [vmem:[%s10 + $0x22c] sm:$0xf]
      %v1708 = vld [vmem:[%s10 + $0x230] sm:$0xff]
      %v1709 = vld [vmem:[%s10 + $0x238] sm:$0xff]
      %v1710 = vld [vmem:[%s10 + $0x240] sm:$0xff]
      %v1711 = vld [vmem:[%s10 + $0x248] sm:$0xf]
      %v1712 = vld [vmem:[%s10 + $0x24c] sm:$0xff]
      %v1713 = vld [vmem:[%s10 + $0x254] sm:$0xff]
      %v1714 = vld [vmem:[%s10 + $0x25c] sm:$0xff]
      %v1715 = vld [vmem:[%s10 + $0x264] sm:$0xf]
      %v1716 = vld [vmem:[%s10 + $0x268] sm:$0xff]
      %v1717 = vld [vmem:[%s10 + $0x270] sm:$0xff]
      %v1718 = vld [vmem:[%s10 + $0x278] sm:$0xff]
      %v1719 = vld [vmem:[%s10 + $0x280] sm:$0xf]
      %v1720 = vld [vmem:[%s10 + $0x284] sm:$0xff]
      %v1721 = vld [vmem:[%s10 + $0x28c] sm:$0xff]
      %v1722 = vld [vmem:[%s10 + $0x294] sm:$0xff]
      %v1723 = vld [vmem:[%s10 + $0x29c] sm:$0xf]
      %v1724 = vld [vmem:[%s10 + $0x2a0] sm:$0xff]
      %v1725 = vld [vmem:[%s10 + $0x2a8] sm:$0xff]
      %v1726 = vld [vmem:[%s10 + $0x2b0] sm:$0xff]
      %v1727 = vld [vmem:[%s10 + $0x2b8] sm:$0xf]
      %v1728 = vld [vmem:[%s10 + $0x2bc] sm:$0xff]
      %v1729 = vld [vmem:[%s10 + $0x2c4] sm:$0xff]
      %v1730 = vld [vmem:[%s10 + $0x2cc] sm:$0xff]
      %v1731 = vld [vmem:[%s10 + $0x2d4] sm:$0xf]
      %v1732 = vld [vmem:[%s10 + $0x2d8] sm:$0xff]
      %v1733 = vld [vmem:[%s10 + $0x2e0] sm:$0xff]
      %v1734 = vld [vmem:[%s10 + $0x2e8] sm:$0xff]
      %v1735 = vld [vmem:[%s10 + $0x2f0] sm:$0xf]
      %v1736 = vld [vmem:[%s10 + $0x2f4] sm:$0xff]
      %v1737 = vld [vmem:[%s10 + $0x2fc] sm:$0xff]
      %v1738 = vld [vmem:[%s10 + $0x304] sm:$0xff]
      %v1739 = vld [vmem:[%s10 + $0x30c] sm:$0xf]
      %v1740 = vld [vmem:[%s10 + $0x310] sm:$0xff]
      %v1741 = vld [vmem:[%s10 + $0x318] sm:$0xff]
      %v1742 = vld [vmem:[%s10 + $0x320] sm:$0xff]
      %v1743 = vld [vmem:[%s10 + $0x328] sm:$0xf]
      %v1744 = vld [vmem:[%s10 + $0x32c] sm:$0xff]
      %v1745 = vld [vmem:[%s10 + $0x334] sm:$0xff]
      %v1746 = vld [vmem:[%s10 + $0x33c] sm:$0xff]
      %v1747 = vld [vmem:[%s10 + $0x344] sm:$0xf]
      %v1748 = vld [vmem:[%s10 + $0x348] sm:$0xff]
      %v1749 = vld [vmem:[%s10 + $0x350] sm:$0xff]
      %v1750 = vld [vmem:[%s10 + $0x358] sm:$0xff]
      %v1751 = vld [vmem:[%s10 + $0x360] sm:$0xf]
      %v1752 = vld [vmem:[%s10 + $0x364] sm:$0xff]
      %v1753 = vld [vmem:[%s10 + $0x36c] sm:$0xff]
      %v1754 = vld [vmem:[%s10 + $0x374] sm:$0xff]
      %v1755 = vld [vmem:[%s10 + $0x37c] sm:$0xf]
      %v1756 = vld [vmem:[%s11] sm:$0x7f]
      %v1758 = vlaneseq
      %v1759 = vshrl.u32 %v1758, 7
      %v1760 = vsub.s32 0, %v1759
      %v1761 = vrot.slane %v1756, %v1760
      %v1762 = vlaneseq
      %v1763 = vshrl.u32 %v1762, 7
      %v1764 = vsub.s32 1, %v1763
      %v1765 = vrot.slane %v1756, %v1764
      %v1766 = vlaneseq
      %v1767 = vshrl.u32 %v1766, 7
      %v1768 = vsub.s32 2, %v1767
      %v1769 = vrot.slane %v1756, %v1768
      %v1770 = vlaneseq
      %v1771 = vshrl.u32 %v1770, 7
      %v1772 = vsub.s32 3, %v1771
      %v1773 = vrot.slane %v1756, %v1772
      %v1774 = vlaneseq
      %v1775 = vshrl.u32 %v1774, 7
      %v1776 = vsub.s32 4, %v1775
      %v1777 = vrot.slane %v1756, %v1776
      %v1778 = vlaneseq
      %v1779 = vshrl.u32 %v1778, 7
      %v1780 = vsub.s32 5, %v1779
      %v1781 = vrot.slane %v1756, %v1780
      %v1782 = vlaneseq
      %v1783 = vshrl.u32 %v1782, 7
      %v1784 = vsub.s32 6, %v1783
      %v1785 = vrot.slane %v1756, %v1784
      %v1921 = vunpack.c.l.b16 %v1628
      %v1922 = vunpack.c.h.b16 %v1628
      %v1923 = vunpack.c.l.b16 %v1629
      %v1924 = vunpack.c.h.b16 %v1629
      %v1925 = vunpack.c.l.b16 %v1630
      %v1926 = vunpack.c.h.b16 %v1630
      %v1927 = vunpack.c.l.b16 %v1631
      %v1928 = vunpack.c.l.b16 %v1632
      %v1929 = vunpack.c.h.b16 %v1632
      %v1930 = vunpack.c.l.b16 %v1633
      %v1931 = vunpack.c.h.b16 %v1633
      %v1932 = vunpack.c.l.b16 %v1634
      %v1933 = vunpack.c.h.b16 %v1634
      %v1934 = vunpack.c.l.b16 %v1635
      %v1935 = vunpack.c.l.b16 %v1636
      %v1936 = vunpack.c.h.b16 %v1636
      %v1937 = vunpack.c.l.b16 %v1637
      %v1938 = vunpack.c.h.b16 %v1637
      %v1939 = vunpack.c.l.b16 %v1638
      %v1940 = vunpack.c.h.b16 %v1638
      %v1941 = vunpack.c.l.b16 %v1639
      %v1942 = vunpack.c.l.b16 %v1640
      %v1943 = vunpack.c.h.b16 %v1640
      %v1944 = vunpack.c.l.b16 %v1641
      %v1945 = vunpack.c.h.b16 %v1641
      %v1946 = vunpack.c.l.b16 %v1642
      %v1947 = vunpack.c.h.b16 %v1642
      %v1948 = vunpack.c.l.b16 %v1643
      %v1949 = vunpack.c.l.b16 %v1644
      %v1950 = vunpack.c.h.b16 %v1644
      %v1951 = vunpack.c.l.b16 %v1645
      %v1952 = vunpack.c.h.b16 %v1645
      %v1953 = vunpack.c.l.b16 %v1646
      %v1954 = vunpack.c.h.b16 %v1646
      %v1955 = vunpack.c.l.b16 %v1647
      %v1956 = vunpack.c.l.b16 %v1648
      %v1957 = vunpack.c.h.b16 %v1648
      %v1958 = vunpack.c.l.b16 %v1649
      %v1959 = vunpack.c.h.b16 %v1649
      %v1960 = vunpack.c.l.b16 %v1650
      %v1961 = vunpack.c.h.b16 %v1650
      %v1962 = vunpack.c.l.b16 %v1651
      %v1963 = vunpack.c.l.b16 %v1652
      %v1964 = vunpack.c.h.b16 %v1652
      %v1965 = vunpack.c.l.b16 %v1653
      %v1966 = vunpack.c.h.b16 %v1653
      %v1967 = vunpack.c.l.b16 %v1654
      %v1968 = vunpack.c.h.b16 %v1654
      %v1969 = vunpack.c.l.b16 %v1655
      %v1970 = vunpack.c.l.b16 %v1656
      %v1971 = vunpack.c.h.b16 %v1656
      %v1972 = vunpack.c.l.b16 %v1657
      %v1973 = vunpack.c.h.b16 %v1657
      %v1974 = vunpack.c.l.b16 %v1658
      %v1975 = vunpack.c.h.b16 %v1658
      %v1976 = vunpack.c.l.b16 %v1659
      %v1977 = vunpack.c.l.b16 %v1660
      %v1978 = vunpack.c.h.b16 %v1660
      %v1979 = vunpack.c.l.b16 %v1661
      %v1980 = vunpack.c.h.b16 %v1661
      %v1981 = vunpack.c.l.b16 %v1662
      %v1982 = vunpack.c.h.b16 %v1662
      %v1983 = vunpack.c.l.b16 %v1663
      %v1984 = vunpack.c.l.b16 %v1664
      %v1985 = vunpack.c.h.b16 %v1664
      %v1986 = vunpack.c.l.b16 %v1665
      %v1987 = vunpack.c.h.b16 %v1665
      %v1988 = vunpack.c.l.b16 %v1666
      %v1989 = vunpack.c.h.b16 %v1666
      %v1990 = vunpack.c.l.b16 %v1667
      %v1991 = vunpack.c.l.b16 %v1668
      %v1992 = vunpack.c.h.b16 %v1668
      %v1993 = vunpack.c.l.b16 %v1669
      %v1994 = vunpack.c.h.b16 %v1669
      %v1995 = vunpack.c.l.b16 %v1670
      %v1996 = vunpack.c.h.b16 %v1670
      %v1997 = vunpack.c.l.b16 %v1671
      %v1998 = vunpack.c.l.b16 %v1672
      %v1999 = vunpack.c.h.b16 %v1672
      %v2000 = vunpack.c.l.b16 %v1673
      %v2001 = vunpack.c.h.b16 %v1673
      %v2002 = vunpack.c.l.b16 %v1674
      %v2003 = vunpack.c.h.b16 %v1674
      %v2004 = vunpack.c.l.b16 %v1675
      %v2005 = vunpack.c.l.b16 %v1676
      %v2006 = vunpack.c.h.b16 %v1676
      %v2007 = vunpack.c.l.b16 %v1677
      %v2008 = vunpack.c.h.b16 %v1677
      %v2009 = vunpack.c.l.b16 %v1678
      %v2010 = vunpack.c.h.b16 %v1678
      %v2011 = vunpack.c.l.b16 %v1679
      %v2012 = vunpack.c.l.b16 %v1680
      %v2013 = vunpack.c.h.b16 %v1680
      %v2014 = vunpack.c.l.b16 %v1681
      %v2015 = vunpack.c.h.b16 %v1681
      %v2016 = vunpack.c.l.b16 %v1682
      %v2017 = vunpack.c.h.b16 %v1682
      %v2018 = vunpack.c.l.b16 %v1683
      %v2019 = vunpack.c.l.b16 %v1684
      %v2020 = vunpack.c.h.b16 %v1684
      %v2021 = vunpack.c.l.b16 %v1685
      %v2022 = vunpack.c.h.b16 %v1685
      %v2023 = vunpack.c.l.b16 %v1686
      %v2024 = vunpack.c.h.b16 %v1686
      %v2025 = vunpack.c.l.b16 %v1687
      %v2026 = vunpack.c.l.b16 %v1688
      %v2027 = vunpack.c.h.b16 %v1688
      %v2028 = vunpack.c.l.b16 %v1689
      %v2029 = vunpack.c.h.b16 %v1689
      %v2030 = vunpack.c.l.b16 %v1690
      %v2031 = vunpack.c.h.b16 %v1690
      %v2032 = vunpack.c.l.b16 %v1691
      %v2033 = vunpack.c.l.b16 %v1692
      %v2034 = vunpack.c.h.b16 %v1692
      %v2035 = vunpack.c.l.b16 %v1693
      %v2036 = vunpack.c.h.b16 %v1693
      %v2037 = vunpack.c.l.b16 %v1694
      %v2038 = vunpack.c.h.b16 %v1694
      %v2039 = vunpack.c.l.b16 %v1695
      %v2040 = vunpack.c.l.b16 %v1696
      %v2041 = vunpack.c.h.b16 %v1696
      %v2042 = vunpack.c.l.b16 %v1697
      %v2043 = vunpack.c.h.b16 %v1697
      %v2044 = vunpack.c.l.b16 %v1698
      %v2045 = vunpack.c.h.b16 %v1698
      %v2046 = vunpack.c.l.b16 %v1699
      %v2047 = vunpack.c.l.b16 %v1700
      %v2048 = vunpack.c.h.b16 %v1700
      %v2049 = vunpack.c.l.b16 %v1701
      %v2050 = vunpack.c.h.b16 %v1701
      %v2051 = vunpack.c.l.b16 %v1702
      %v2052 = vunpack.c.h.b16 %v1702
      %v2053 = vunpack.c.l.b16 %v1703
      %v2054 = vunpack.c.l.b16 %v1704
      %v2055 = vunpack.c.h.b16 %v1704
      %v2056 = vunpack.c.l.b16 %v1705
      %v2057 = vunpack.c.h.b16 %v1705
      %v2058 = vunpack.c.l.b16 %v1706
      %v2059 = vunpack.c.h.b16 %v1706
      %v2060 = vunpack.c.l.b16 %v1707
      %v2061 = vunpack.c.l.b16 %v1708
      %v2062 = vunpack.c.h.b16 %v1708
      %v2063 = vunpack.c.l.b16 %v1709
      %v2064 = vunpack.c.h.b16 %v1709
      %v2065 = vunpack.c.l.b16 %v1710
      %v2066 = vunpack.c.h.b16 %v1710
      %v2067 = vunpack.c.l.b16 %v1711
      %v2068 = vunpack.c.l.b16 %v1712
      %v2069 = vunpack.c.h.b16 %v1712
      %v2070 = vunpack.c.l.b16 %v1713
      %v2071 = vunpack.c.h.b16 %v1713
      %v2072 = vunpack.c.l.b16 %v1714
      %v2073 = vunpack.c.h.b16 %v1714
      %v2074 = vunpack.c.l.b16 %v1715
      %v2075 = vunpack.c.l.b16 %v1716
      %v2076 = vunpack.c.h.b16 %v1716
      %v2077 = vunpack.c.l.b16 %v1717
      %v2078 = vunpack.c.h.b16 %v1717
      %v2079 = vunpack.c.l.b16 %v1718
      %v2080 = vunpack.c.h.b16 %v1718
      %v2081 = vunpack.c.l.b16 %v1719
      %v2082 = vunpack.c.l.b16 %v1720
      %v2083 = vunpack.c.h.b16 %v1720
      %v2084 = vunpack.c.l.b16 %v1721
      %v2085 = vunpack.c.h.b16 %v1721
      %v2086 = vunpack.c.l.b16 %v1722
      %v2087 = vunpack.c.h.b16 %v1722
      %v2088 = vunpack.c.l.b16 %v1723
      %v2089 = vunpack.c.l.b16 %v1724
      %v2090 = vunpack.c.h.b16 %v1724
      %v2091 = vunpack.c.l.b16 %v1725
      %v2092 = vunpack.c.h.b16 %v1725
      %v2093 = vunpack.c.l.b16 %v1726
      %v2094 = vunpack.c.h.b16 %v1726
      %v2095 = vunpack.c.l.b16 %v1727
      %v2096 = vunpack.c.l.b16 %v1728
      %v2097 = vunpack.c.h.b16 %v1728
      %v2098 = vunpack.c.l.b16 %v1729
      %v2099 = vunpack.c.h.b16 %v1729
      %v2100 = vunpack.c.l.b16 %v1730
      %v2101 = vunpack.c.h.b16 %v1730
      %v2102 = vunpack.c.l.b16 %v1731
      %v2103 = vunpack.c.l.b16 %v1732
      %v2104 = vunpack.c.h.b16 %v1732
      %v2105 = vunpack.c.l.b16 %v1733
      %v2106 = vunpack.c.h.b16 %v1733
      %v2107 = vunpack.c.l.b16 %v1734
      %v2108 = vunpack.c.h.b16 %v1734
      %v2109 = vunpack.c.l.b16 %v1735
      %v2110 = vunpack.c.l.b16 %v1736
      %v2111 = vunpack.c.h.b16 %v1736
      %v2112 = vunpack.c.l.b16 %v1737
      %v2113 = vunpack.c.h.b16 %v1737
      %v2114 = vunpack.c.l.b16 %v1738
      %v2115 = vunpack.c.h.b16 %v1738
      %v2116 = vunpack.c.l.b16 %v1739
      %v2117 = vunpack.c.l.b16 %v1740
      %v2118 = vunpack.c.h.b16 %v1740
      %v2119 = vunpack.c.l.b16 %v1741
      %v2120 = vunpack.c.h.b16 %v1741
      %v2121 = vunpack.c.l.b16 %v1742
      %v2122 = vunpack.c.h.b16 %v1742
      %v2123 = vunpack.c.l.b16 %v1743
      %v2124 = vunpack.c.l.b16 %v1744
      %v2125 = vunpack.c.h.b16 %v1744
      %v2126 = vunpack.c.l.b16 %v1745
      %v2127 = vunpack.c.h.b16 %v1745
      %v2128 = vunpack.c.l.b16 %v1746
      %v2129 = vunpack.c.h.b16 %v1746
      %v2130 = vunpack.c.l.b16 %v1747
      %v2131 = vunpack.c.l.b16 %v1748
      %v2132 = vunpack.c.h.b16 %v1748
      %v2133 = vunpack.c.l.b16 %v1749
      %v2134 = vunpack.c.h.b16 %v1749
      %v2135 = vunpack.c.l.b16 %v1750
      %v2136 = vunpack.c.h.b16 %v1750
      %v2137 = vunpack.c.l.b16 %v1751
      %v2138 = vunpack.c.l.b16 %v1752
      %v2139 = vunpack.c.h.b16 %v1752
      %v2140 = vunpack.c.l.b16 %v1753
      %v2141 = vunpack.c.h.b16 %v1753
      %v2142 = vunpack.c.l.b16 %v1754
      %v2143 = vunpack.c.h.b16 %v1754
      %v2144 = vunpack.c.l.b16 %v1755
      %v2145 = vpack.c.b16 %v1928, %v1921
      %v2146 = vpack.c.b16 %v1929, %v1922
      %v2147 = vpack.c.b16 %v1930, %v1923
      %v2148 = vpack.c.b16 %v1931, %v1924
      %v2149 = vpack.c.b16 %v1932, %v1925
      %v2150 = vpack.c.b16 %v1933, %v1926
      %v2151 = vpack.c.b16 %v1934, %v1927
      %v2152 = vpack.c.b16 %v1942, %v1935
      %v2153 = vpack.c.b16 %v1943, %v1936
      %v2154 = vpack.c.b16 %v1944, %v1937
      %v2155 = vpack.c.b16 %v1945, %v1938
      %v2156 = vpack.c.b16 %v1946, %v1939
      %v2157 = vpack.c.b16 %v1947, %v1940
      %v2158 = vpack.c.b16 %v1948, %v1941
      %v2159 = vpack.c.b16 %v1956, %v1949
      %v2160 = vpack.c.b16 %v1957, %v1950
      %v2161 = vpack.c.b16 %v1958, %v1951
      %v2162 = vpack.c.b16 %v1959, %v1952
      %v2163 = vpack.c.b16 %v1960, %v1953
      %v2164 = vpack.c.b16 %v1961, %v1954
      %v2165 = vpack.c.b16 %v1962, %v1955
      %v2166 = vpack.c.b16 %v1970, %v1963
      %v2167 = vpack.c.b16 %v1971, %v1964
      %v2168 = vpack.c.b16 %v1972, %v1965
      %v2169 = vpack.c.b16 %v1973, %v1966
      %v2170 = vpack.c.b16 %v1974, %v1967
      %v2171 = vpack.c.b16 %v1975, %v1968
      %v2172 = vpack.c.b16 %v1976, %v1969
      %v2173 = vpack.c.b16 %v1984, %v1977
      %v2174 = vpack.c.b16 %v1985, %v1978
      %v2175 = vpack.c.b16 %v1986, %v1979
      %v2176 = vpack.c.b16 %v1987, %v1980
      %v2177 = vpack.c.b16 %v1988, %v1981
      %v2178 = vpack.c.b16 %v1989, %v1982
      %v2179 = vpack.c.b16 %v1990, %v1983
      %v2180 = vpack.c.b16 %v1998, %v1991
      %v2181 = vpack.c.b16 %v1999, %v1992
      %v2182 = vpack.c.b16 %v2000, %v1993
      %v2183 = vpack.c.b16 %v2001, %v1994
      %v2184 = vpack.c.b16 %v2002, %v1995
      %v2185 = vpack.c.b16 %v2003, %v1996
      %v2186 = vpack.c.b16 %v2004, %v1997
      %v2187 = vpack.c.b16 %v2012, %v2005
      %v2188 = vpack.c.b16 %v2013, %v2006
      %v2189 = vpack.c.b16 %v2014, %v2007
      %v2190 = vpack.c.b16 %v2015, %v2008
      %v2191 = vpack.c.b16 %v2016, %v2009
      %v2192 = vpack.c.b16 %v2017, %v2010
      %v2193 = vpack.c.b16 %v2018, %v2011
      %v2194 = vpack.c.b16 %v2026, %v2019
      %v2195 = vpack.c.b16 %v2027, %v2020
      %v2196 = vpack.c.b16 %v2028, %v2021
      %v2197 = vpack.c.b16 %v2029, %v2022
      %v2198 = vpack.c.b16 %v2030, %v2023
      %v2199 = vpack.c.b16 %v2031, %v2024
      %v2200 = vpack.c.b16 %v2032, %v2025
      %v2201 = vpack.c.b16 %v2040, %v2033
      %v2202 = vpack.c.b16 %v2041, %v2034
      %v2203 = vpack.c.b16 %v2042, %v2035
      %v2204 = vpack.c.b16 %v2043, %v2036
      %v2205 = vpack.c.b16 %v2044, %v2037
      %v2206 = vpack.c.b16 %v2045, %v2038
      %v2207 = vpack.c.b16 %v2046, %v2039
      %v2208 = vpack.c.b16 %v2054, %v2047
      %v2209 = vpack.c.b16 %v2055, %v2048
      %v2210 = vpack.c.b16 %v2056, %v2049
      %v2211 = vpack.c.b16 %v2057, %v2050
      %v2212 = vpack.c.b16 %v2058, %v2051
      %v2213 = vpack.c.b16 %v2059, %v2052
      %v2214 = vpack.c.b16 %v2060, %v2053
      %v2215 = vpack.c.b16 %v2068, %v2061
      %v2216 = vpack.c.b16 %v2069, %v2062
      %v2217 = vpack.c.b16 %v2070, %v2063
      %v2218 = vpack.c.b16 %v2071, %v2064
      %v2219 = vpack.c.b16 %v2072, %v2065
      %v2220 = vpack.c.b16 %v2073, %v2066
      %v2221 = vpack.c.b16 %v2074, %v2067
      %v2222 = vpack.c.b16 %v2082, %v2075
      %v2223 = vpack.c.b16 %v2083, %v2076
      %v2224 = vpack.c.b16 %v2084, %v2077
      %v2225 = vpack.c.b16 %v2085, %v2078
      %v2226 = vpack.c.b16 %v2086, %v2079
      %v2227 = vpack.c.b16 %v2087, %v2080
      %v2228 = vpack.c.b16 %v2088, %v2081
      %v2229 = vpack.c.b16 %v2096, %v2089
      %v2230 = vpack.c.b16 %v2097, %v2090
      %v2231 = vpack.c.b16 %v2098, %v2091
      %v2232 = vpack.c.b16 %v2099, %v2092
      %v2233 = vpack.c.b16 %v2100, %v2093
      %v2234 = vpack.c.b16 %v2101, %v2094
      %v2235 = vpack.c.b16 %v2102, %v2095
      %v2236 = vpack.c.b16 %v2110, %v2103
      %v2237 = vpack.c.b16 %v2111, %v2104
      %v2238 = vpack.c.b16 %v2112, %v2105
      %v2239 = vpack.c.b16 %v2113, %v2106
      %v2240 = vpack.c.b16 %v2114, %v2107
      %v2241 = vpack.c.b16 %v2115, %v2108
      %v2242 = vpack.c.b16 %v2116, %v2109
      %v2243 = vpack.c.b16 %v2124, %v2117
      %v2244 = vpack.c.b16 %v2125, %v2118
      %v2245 = vpack.c.b16 %v2126, %v2119
      %v2246 = vpack.c.b16 %v2127, %v2120
      %v2247 = vpack.c.b16 %v2128, %v2121
      %v2248 = vpack.c.b16 %v2129, %v2122
      %v2249 = vpack.c.b16 %v2130, %v2123
      %v2250 = vpack.c.b16 %v2138, %v2131
      %v2251 = vpack.c.b16 %v2139, %v2132
      %v2252 = vpack.c.b16 %v2140, %v2133
      %v2253 = vpack.c.b16 %v2141, %v2134
      %v2254 = vpack.c.b16 %v2142, %v2135
      %v2255 = vpack.c.b16 %v2143, %v2136
      %v2256 = vpack.c.b16 %v2144, %v2137
      %2369 = vmatprep.subr.bf16.mxu0 %v2146
      %2370 = vmatpush1.bf16.msra.mxu0 %v2145
      %2371 = vmatprep.subr.bf16.mxu0 %v2153
      %2372 = vmatpush1.bf16.msra.mxu0 %v2152
      %2373 = vmatprep.subr.bf16.mxu0 %v2160
      %2374 = vmatpush1.bf16.msra.mxu0 %v2159
      %2375 = vmatprep.subr.bf16.mxu0 %v2167
      %2376 = vmatpush1.bf16.msra.mxu0 %v2166
      %2377 = vmatprep.subr.bf16.mxu0 %v2174
      %2378 = vmatpush1.bf16.msra.mxu0 %v2173
      %2379 = vmatprep.subr.bf16.mxu0 %v2181
      %2380 = vmatpush1.bf16.msra.mxu0 %v2180
      %2381 = vmatprep.subr.bf16.mxu0 %v2188
      %2382 = vmatpush1.bf16.msra.mxu0 %v2187
      %2383 = vmatprep.subr.bf16.mxu0 %v2195
      %2384 = vmatpush1.bf16.msra.mxu0 %v2194
      %2385 = vmatprep.subr.bf16.mxu0 %v2202
      %2386 = vmatpush1.bf16.msra.mxu0 %v2201
      %2387 = vmatprep.subr.bf16.mxu0 %v2209
      %2388 = vmatpush1.bf16.msra.mxu0 %v2208
      %2389 = vmatprep.subr.bf16.mxu0 %v2216
      %2390 = vmatpush1.bf16.msra.mxu0 %v2215
      %2391 = vmatprep.subr.bf16.mxu0 %v2223
      %2392 = vmatpush1.bf16.msra.mxu0 %v2222
      %2393 = vmatprep.subr.bf16.mxu0 %v2230
      %2394 = vmatpush1.bf16.msra.mxu0 %v2229
      %2395 = vmatprep.subr.bf16.mxu0 %v2237
      %2396 = vmatpush1.bf16.msra.mxu0 %v2236
      %2397 = vmatprep.subr.bf16.mxu0 %v2244
      %2398 = vmatpush1.bf16.msra.mxu0 %v2243
      %2399 = vmatprep.subr.bf16.mxu0 %v2251
      %2400 = vmatpush1.bf16.msra.mxu0 %v2250
      %2401 = vmatprep.mubr.bf16.mxu0 %v1627
      %2402 = vmatmul.mubr.bf16.gmra.mrb[0].mxu0 %v1626
      %v2403 = vpop.f32.mrb[0].mxu0
      %v2404 = vadd.f32 %v1761, %v2403
      %v2405 = vpop.f32.mrb[0].mxu0
      %v2406 = vadd.f32 %v1765, %v2405
      %v2407 = vpop.f32.mrb[0].mxu0
      %v2408 = vpop.f32.mrb[0].mxu0
      %2409 = vdwg.mxu0
      %2410 = vmatprep.subr.bf16.mxu0 %v2148
      %2411 = vmatpush1.bf16.msra.mxu0 %v2147
      %2412 = vmatprep.subr.bf16.mxu0 %v2155
      %2413 = vmatpush1.bf16.msra.mxu0 %v2154
      %2414 = vmatprep.subr.bf16.mxu0 %v2162
      %2415 = vmatpush1.bf16.msra.mxu0 %v2161
      %2416 = vmatprep.subr.bf16.mxu0 %v2169
      %2417 = vmatpush1.bf16.msra.mxu0 %v2168
      %2418 = vmatprep.subr.bf16.mxu0 %v2176
      %2419 = vmatpush1.bf16.msra.mxu0 %v2175
      %2420 = vmatprep.subr.bf16.mxu0 %v2183
      %2421 = vmatpush1.bf16.msra.mxu0 %v2182
      %2422 = vmatprep.subr.bf16.mxu0 %v2190
      %2423 = vmatpush1.bf16.msra.mxu0 %v2189
      %2424 = vmatprep.subr.bf16.mxu0 %v2197
      %2425 = vmatpush1.bf16.msra.mxu0 %v2196
      %2426 = vmatprep.subr.bf16.mxu0 %v2204
      %2427 = vmatpush1.bf16.msra.mxu0 %v2203
      %2428 = vmatprep.subr.bf16.mxu0 %v2211
      %2429 = vmatpush1.bf16.msra.mxu0 %v2210
      %2430 = vmatprep.subr.bf16.mxu0 %v2218
      %2431 = vmatpush1.bf16.msra.mxu0 %v2217
      %2432 = vmatprep.subr.bf16.mxu0 %v2225
      %2433 = vmatpush1.bf16.msra.mxu0 %v2224
      %2434 = vmatprep.subr.bf16.mxu0 %v2232
      %2435 = vmatpush1.bf16.msra.mxu0 %v2231
      %2436 = vmatprep.subr.bf16.mxu0 %v2239
      %2437 = vmatpush1.bf16.msra.mxu0 %v2238
      %2438 = vmatprep.subr.bf16.mxu0 %v2246
      %2439 = vmatpush1.bf16.msra.mxu0 %v2245
      %2440 = vmatprep.subr.bf16.mxu0 %v2253
      %2441 = vmatpush1.bf16.msra.mxu0 %v2252
      %2442 = vmatprep.mubr.bf16.mxu0 %v1627
      %2443 = vmatmul.mubr.bf16.gmra.mrb[0].mxu0 %v1626
      %v2444 = vpop.f32.mrb[0].mxu0
      %v2445 = vadd.f32 %v1769, %v2444
      %v2446 = vpop.f32.mrb[0].mxu0
      %v2447 = vadd.f32 %v1773, %v2446
      %v2448 = vpop.f32.mrb[0].mxu0
      %v2449 = vpop.f32.mrb[0].mxu0
      %2450 = vdwg.mxu0
      %2451 = vmatprep.subr.bf16.mxu0 %v2150
      %2452 = vmatpush1.bf16.msra.mxu0 %v2149
      %2453 = vmatprep.subr.bf16.mxu0 %v2157
      %2454 = vmatpush1.bf16.msra.mxu0 %v2156
      %2455 = vmatprep.subr.bf16.mxu0 %v2164
      %2456 = vmatpush1.bf16.msra.mxu0 %v2163
      %2457 = vmatprep.subr.bf16.mxu0 %v2171
      %2458 = vmatpush1.bf16.msra.mxu0 %v2170
      %2459 = vmatprep.subr.bf16.mxu0 %v2178
      %2460 = vmatpush1.bf16.msra.mxu0 %v2177
      %2461 = vmatprep.subr.bf16.mxu0 %v2185
      %2462 = vmatpush1.bf16.msra.mxu0 %v2184
      %2463 = vmatprep.subr.bf16.mxu0 %v2192
      %2464 = vmatpush1.bf16.msra.mxu0 %v2191
      %2465 = vmatprep.subr.bf16.mxu0 %v2199
      %2466 = vmatpush1.bf16.msra.mxu0 %v2198
      %2467 = vmatprep.subr.bf16.mxu0 %v2206
      %2468 = vmatpush1.bf16.msra.mxu0 %v2205
      %2469 = vmatprep.subr.bf16.mxu0 %v2213
      %2470 = vmatpush1.bf16.msra.mxu0 %v2212
      %2471 = vmatprep.subr.bf16.mxu0 %v2220
      %2472 = vmatpush1.bf16.msra.mxu0 %v2219
      %2473 = vmatprep.subr.bf16.mxu0 %v2227
      %2474 = vmatpush1.bf16.msra.mxu0 %v2226
      %2475 = vmatprep.subr.bf16.mxu0 %v2234
      %2476 = vmatpush1.bf16.msra.mxu0 %v2233
      %2477 = vmatprep.subr.bf16.mxu0 %v2241
      %2478 = vmatpush1.bf16.msra.mxu0 %v2240
      %2479 = vmatprep.subr.bf16.mxu0 %v2248
      %2480 = vmatpush1.bf16.msra.mxu0 %v2247
      %2481 = vmatprep.subr.bf16.mxu0 %v2255
      %2482 = vmatpush1.bf16.msra.mxu0 %v2254
      %2483 = vmatprep.mubr.bf16.mxu0 %v1627
      %2484 = vmatmul.mubr.bf16.gmra.mrb[0].mxu0 %v1626
      %v2485 = vpop.f32.mrb[0].mxu0
      %v2486 = vadd.f32 %v1777, %v2485
      %v2487 = vpop.f32.mrb[0].mxu0
      %v2488 = vadd.f32 %v1781, %v2487
      %v2489 = vpop.f32.mrb[0].mxu0
      %v2490 = vpop.f32.mrb[0].mxu0
      %2491 = vdwg.mxu0
      %2492 = vmatprep.subr.bf16.mxu0 0
      %2493 = vmatpush1.bf16.msra.mxu0 %v2151
      %2494 = vmatprep.subr.bf16.mxu0 0
      %2495 = vmatpush1.bf16.msra.mxu0 %v2158
      %2496 = vmatprep.subr.bf16.mxu0 0
      %2497 = vmatpush1.bf16.msra.mxu0 %v2165
      %2498 = vmatprep.subr.bf16.mxu0 0
      %2499 = vmatpush1.bf16.msra.mxu0 %v2172
      %2500 = vmatprep.subr.bf16.mxu0 0
      %2501 = vmatpush1.bf16.msra.mxu0 %v2179
      %2502 = vmatprep.subr.bf16.mxu0 0
      %2503 = vmatpush1.bf16.msra.mxu0 %v2186
      %2504 = vmatprep.subr.bf16.mxu0 0
      %2505 = vmatpush1.bf16.msra.mxu0 %v2193
      %2506 = vmatprep.subr.bf16.mxu0 0
      %2507 = vmatpush1.bf16.msra.mxu0 %v2200
      %2508 = vmatprep.subr.bf16.mxu0 0
      %2509 = vmatpush1.bf16.msra.mxu0 %v2207
      %2510 = vmatprep.subr.bf16.mxu0 0
      %2511 = vmatpush1.bf16.msra.mxu0 %v2214
      %2512 = vmatprep.subr.bf16.mxu0 0
      %2513 = vmatpush1.bf16.msra.mxu0 %v2221
      %2514 = vmatprep.subr.bf16.mxu0 0
      %2515 = vmatpush1.bf16.msra.mxu0 %v2228
      %2516 = vmatprep.subr.bf16.mxu0 0
      %2517 = vmatpush1.bf16.msra.mxu0 %v2235
      %2518 = vmatprep.subr.bf16.mxu0 0
      %2519 = vmatpush1.bf16.msra.mxu0 %v2242
      %2520 = vmatprep.subr.bf16.mxu0 0
      %2521 = vmatpush1.bf16.msra.mxu0 %v2249
      %2522 = vmatprep.subr.bf16.mxu0 0
      %2523 = vmatpush1.bf16.msra.mxu0 %v2256
      %2524 = vmatprep.mubr.bf16.mxu0 %v1627
      %2525 = vmatmul.mubr.bf16.gmra.mrb[0].mxu0 %v1626
      %v2526 = vpop.f32.mrb[0].mxu0
      %v2527 = vadd.f32 %v1785, %v2526
      %v2528 = vpop.f32.mrb[0].mxu0
      %v2529 = vpop.f32.mrb[0].mxu0
      %v2530 = vpop.f32.mrb[0].mxu0
      %2531 = vdwg.mxu0
      %v2532 = vsub.f32 0.0, %v2404
      %v2533 = vsub.f32 0.0, %v2406
      %v2534 = vsub.f32 0.0, %v2445
      %v2535 = vsub.f32 0.0, %v2447
      %v2536 = vsub.f32 0.0, %v2486
      %v2537 = vsub.f32 0.0, %v2488
      %v2538 = vsub.f32 0.0, %v2527
      %v2539 = vmul.f32 %v2532, 1.442695
      %v2540 = vpow.pop %v2539
      %v2541 = vmul.f32 %v2533, 1.442695
      %v2542 = vpow.pop %v2541
      %v2543 = vmul.f32 %v2534, 1.442695
      %v2544 = vpow.pop %v2543
      %v2545 = vmul.f32 %v2535, 1.442695
      %v2546 = vpow.pop %v2545
      %v2547 = vmul.f32 %v2536, 1.442695
      %v2548 = vpow.pop %v2547
      %v2549 = vmul.f32 %v2537, 1.442695
      %v2550 = vpow.pop %v2549
      %v2551 = vmul.f32 %v2538, 1.442695
      %v2552 = vpow.pop %v2551
      %v2553 = vadd.f32 %v2540, 1.0
      %v2554 = vadd.f32 %v2542, 1.0
      %v2555 = vadd.f32 %v2544, 1.0
      %v2556 = vadd.f32 %v2546, 1.0
      %v2557 = vadd.f32 %v2548, 1.0
      %v2558 = vadd.f32 %v2550, 1.0
      %v2559 = vadd.f32 %v2552, 1.0
      %v2560 = vrcp.pop %v2553
      %v2561 = vrcp.pop %v2554
      %v2562 = vrcp.pop %v2555
      %v2563 = vrcp.pop %v2556
      %v2564 = vrcp.pop %v2557
      %v2565 = vrcp.pop %v2558
      %v2566 = vrcp.pop %v2559
      %2567 = vst [vmem:[%s430] sm:$0xff] %v2560
      %2568 = vst [vmem:[%s430 + $0x8] sm:$0xff] %v2561
      %2569 = vst [vmem:[%s430 + $0x10] sm:$0xff] %v2562
      %2570 = vst [vmem:[%s430 + $0x18] sm:$0xff] %v2563
      %2571 = vst [vmem:[%s430 + $0x20] sm:$0xff] %v2564
      %2572 = vst [vmem:[%s430 + $0x28] sm:$0xff] %v2565
      %2573 = vst.msk [vmem:[%s430 + $0x30] sm:$0xff] %vm1097, %v2566
      %p2574 = scmp.lt.s32.totalorder %s23, 1
      %s2575 = scalar_select %p2574, %s23, 1
      %s2576 = smul.addr %s2575, 7
      %s2577 = smul.addr %s2576, 8
      %s2578 = scalar_lea.vmem %s12, %s2577
      // Predicated region
      $region69: #{conditional_autoencoder_forward.1} parent=67 // pred_check
        %p2579 = pneg %p303
      $region70: #{conditional_autoencoder_forward.1} parent=67 // pred_check_branch
        %2581 = sbr.rel (%p2579) target = $region72
      $region71: #{conditional_autoencoder_forward.1} parent=67 // pred_region
        _
      $region72: #{conditional_autoencoder_forward.1} parent=67 // pred_fallthru
        _
    $region68: #{conditional_autoencoder_forward.1} parent=5 // pred_fallthru
      _
    %p2582 = scmp.le.s32.totalorder 2, %s18
    // Predicated region
    $region73: #{conditional_autoencoder_forward.1} parent=5 // pred_check
      %p2583 = pneg %p2582
    $region74: #{conditional_autoencoder_forward.1} parent=5 // pred_check_branch
      %2585 = sbr.rel (%p2583) target = $region76
    $region75: #{conditional_autoencoder_forward.1} parent=5 // pred_region
      %s2586 = ssub.s32 %s18, 2
      // Predicated region
      $region77: #{conditional_autoencoder_forward.1} parent=75 // pred_check
        %p2587 = pneg %p309
      $region78: #{conditional_autoencoder_forward.1} parent=75 // pred_check_branch
        %2589 = sbr.rel (%p2587) target = $region80
      $region79: #{conditional_autoencoder_forward.1} parent=75 // pred_region
        %p2590 = scmp.lt.s32.totalorder %s24, 1
        %s2591 = scalar_select %p2590, %s24, 1
        %s2592 = smul.addr %s2591, 7
        %s2593 = smul.addr %s2592, 8
        %s2594 = scalar_lea.vmem %s12, %s2593
      $region80: #{conditional_autoencoder_forward.1} parent=75 // pred_fallthru
        _
    $region76: #{conditional_autoencoder_forward.1} parent=5 // pred_fallthru
      _
  $region6: #{conditional_autoencoder_forward.1} parent=0 // loop_footer
    %s22 = sadd.s32 1, %s18
  $region7: #{conditional_autoencoder_forward.1} parent=0 // loop_footer_branch
    %17 = sbr.rel target = $region3
  $region8: #{conditional_autoencoder_forward.1} parent=0 // loop_exit
    _

</llo_original>
